<compile_context>
chip_gen: v7x
topology: tpu7x:2x2x1
jax: 0.10.0
libtpu: 0.0.40
codegen_flags: <defaults>
</compile_context>

<pallas_src>
import functools

import jax
import jax.numpy as jnp
from jax.experimental import pallas as pl
from jax.experimental.pallas import tpu as pltpu


def _round_up(x, m):
    return (x + m - 1) // m * m


# ----------------------------------------------------------------------------
# Pallas kernel: one GraphSageELayer + the ReLU that follows it in GraphSageE.
#   h   = M @ x + b            (mean aggregation of x_j + edge_weight)
#   out = relu(2 * h / max(||h||_2, 1e-12))
# ----------------------------------------------------------------------------
def _sage_layer_kernel(m_ref, x_ref, b_ref, o_ref, acc_ref, *, d_valid):
    k = pl.program_id(1)

    @pl.when(k == 0)
    def _():
        acc_ref[...] = jnp.zeros_like(acc_ref)

    # MXU: bf16 operands, f32 accumulation.
    acc_ref[...] += jnp.dot(m_ref[...], x_ref[...],
                            preferred_element_type=jnp.float32)

    @pl.when(k == pl.num_programs(1) - 1)
    def _():
        # Add the per-node mean edge weight only to the real (unpadded) feature
        # columns so padded lanes stay exactly zero (keeps the L2 norm correct and
        # keeps the padding clean for the next layer's input).
        dp = acc_ref.shape[1]
        col = jax.lax.broadcasted_iota(jnp.int32, (1, dp), 1)
        col_mask = (col < d_valid).astype(jnp.float32)
        h = acc_ref[...] + b_ref[...] * col_mask                       # (TM, Dp)

        # F.normalize(h, p=2, dim=1, eps=1e-12):
        #   max(sumsq, 1e-24) <=> max(||h||, 1e-12); rsqrt runs on the EUP.
        sumsq = jnp.sum(h * h, axis=1, keepdims=True)
        inv = jax.lax.rsqrt(jnp.maximum(sumsq, 1e-24))

        # out = out_f + out_b = 2 * normalize(h), then nn.ReLU().
        o_ref[...] = jnp.maximum(h * (2.0 * inv), 0.0).astype(o_ref.dtype)


def graphsage_layer_pallas(M, b, x, *, d_valid, out_dtype, tile=256):
    """One GraphSageELayer + ReLU.

    M: (Np, Np) bf16 mean-aggregation matrix, b: (Np, 1) f32, x: (Np, Dp) bf16.
    Np % tile == 0, Dp % 128 == 0.  Returns (Np, Dp) in `out_dtype`.
    """
    Np = M.shape[0]
    Dp = x.shape[1]
    assert Np % tile == 0 and Dp % 128 == 0

    n_row_tiles = Np // tile
    grid = (n_row_tiles, Np // tile)

    flops = 2 * Np * Np * Dp
    bytes_accessed = (Np * Np * 2                        # M (bf16), streamed once
                      + n_row_tiles * Np * Dp * 2        # x re-read per row tile (bf16)
                      + Np * 4                           # b (f32)
                      + Np * Dp * jnp.dtype(out_dtype).itemsize)

    return pl.pallas_call(
        functools.partial(_sage_layer_kernel, d_valid=d_valid),
        out_shape=jax.ShapeDtypeStruct((Np, Dp), out_dtype),
        grid_spec=pltpu.PrefetchScalarGridSpec(
            num_scalar_prefetch=0,
            grid=grid,
            in_specs=[
                pl.BlockSpec((tile, tile), lambda i, k: (i, k)),   # M tile
                pl.BlockSpec((tile, Dp), lambda i, k: (k, 0)),     # x tile
                pl.BlockSpec((tile, 1), lambda i, k: (i, 0)),      # b tile
            ],
            out_specs=pl.BlockSpec((tile, Dp), lambda i, k: (i, 0)),
            scratch_shapes=[pltpu.VMEM((tile, Dp), jnp.float32)],
        ),
        compiler_params=pltpu.CompilerParams(
            dimension_semantics=("parallel", "arbitrary"),
            vmem_limit_bytes=32 * 1024 * 1024,
        ),
        cost_estimate=pl.CostEstimate(
            flops=flops, transcendentals=Np, bytes_accessed=bytes_accessed),
    )(M, x, b)


# ----------------------------------------------------------------------------
# Plain-JAX glue: edge list -> dense mean-aggregation operator (index plumbing).
# ----------------------------------------------------------------------------
def build_mean_aggregation(edge_index, edge_weights, num_nodes, n_pad):
    src = edge_index[0]            # x_j gathered from edge_index[0] (source)
    dst = edge_index[1]            # aggregated at edge_index[1] (target)
    w = edge_weights[:, 0].astype(jnp.float32)

    deg = jnp.zeros((num_nodes,), jnp.float32).at[dst].add(jnp.ones_like(w))
    adj = jnp.zeros((n_pad, n_pad), jnp.float32).at[dst, src].add(1.0)
    wsum = jnp.zeros((num_nodes,), jnp.float32).at[dst].add(w)

    inv_deg = jnp.where(deg > 0, 1.0 / jnp.maximum(deg, 1.0), 0.0)
    inv_deg = jnp.pad(inv_deg, (0, n_pad - num_nodes))
    wmean = jnp.pad(wsum, (0, n_pad - num_nodes)) * inv_deg

    M = (adj * inv_deg[:, None]).astype(jnp.bfloat16)    # (Np, Np) mean-aggregation (bf16 MXU)
    b = wmean[:, None]                                   # (Np, 1)  mean edge weight (f32)
    return M, b


# ----------------------------------------------------------------------------
# Module: parameter init (deterministic) + forward.
# ----------------------------------------------------------------------------
def init_graphsage_e_params(key, dim, nr_layers):
    """w_f / w_b per layer: Linear(2*dim, dim) with xavier_normal_ weights.
    NOTE: dead code in the reference forward (update() overwrites h with
    F.normalize(aggr_out)); initialized only to mirror the module's __init__."""
    params = []
    fan_in, fan_out = 2 * dim, dim
    std = (2.0 / (fan_in + fan_out)) ** 0.5
    for _ in range(nr_layers):
        key, k1, k2, k3, k4 = jax.random.split(key, 5)
        bound = 1.0 / (fan_in ** 0.5)
        params.append({
            "w_f": jax.random.normal(k1, (fan_out, fan_in), jnp.float32) * std,
            "b_f": jax.random.uniform(k2, (fan_out,), jnp.float32, -bound, bound),
            "w_b": jax.random.normal(k3, (fan_out, fan_in), jnp.float32) * std,
            "b_b": jax.random.uniform(k4, (fan_out,), jnp.float32, -bound, bound),
        })
    return params


@functools.partial(jax.jit, static_argnames=("nr_layers", "tile"))
def graphsage_e_forward(x, edge_index, edge_weights, nr_layers, tile=256):
    N, D = x.shape
    n_pad = _round_up(N, tile)
    d_pad = _round_up(D, 128)

    M, b = build_mean_aggregation(edge_index, edge_weights, N, n_pad)

    h = jnp.pad(x.astype(jnp.float32), ((0, n_pad - N), (0, d_pad - D)))
    h = h.astype(jnp.bfloat16)
    for layer in range(nr_layers):
        last = layer == nr_layers - 1
        h = graphsage_layer_pallas(
            M, b, h, d_valid=D,
            out_dtype=jnp.float32 if last else jnp.bfloat16,
            tile=tile)
    return h[:N, :D]


# ----------------------------------------------------------------------------
# Pure-JAX reference (exact f32 semantics of the PyTorch module) for validation.
# ----------------------------------------------------------------------------
def graphsage_e_reference(x, edge_index, edge_weights, nr_layers):
    N = x.shape[0]
    src, dst = edge_index[0], edge_index[1]
    w = edge_weights[:, 0].astype(jnp.float32)
    deg = jnp.zeros((N,), jnp.float32).at[dst].add(1.0)
    inv_deg = jnp.where(deg > 0, 1.0 / jnp.maximum(deg, 1.0), 0.0)
    h = x.astype(jnp.float32)
    for _ in range(nr_layers):
        msum = jnp.zeros_like(h).at[dst].add(h[src] + w[:, None])
        aggr = msum * inv_deg[:, None]
        norm = jnp.sqrt(jnp.sum(aggr * aggr, axis=1, keepdims=True))
        hn = aggr / jnp.maximum(norm, 1e-12)
        h = jnp.maximum(2.0 * hn, 0.0)
    return h


# ----------------------------------------------------------------------------
if __name__ == "__main__":
    key = jax.random.PRNGKey(0)
    N, D, E, EDGES_DIM, NR_LAYERS = 64, 32, 256, 1, 2

    k_x, k_src, k_dst, k_w, k_p = jax.random.split(key, 5)
    x = jax.random.normal(k_x, (N, D), jnp.float32)
    edge_index = jnp.stack(
        [jax.random.randint(k_src, (E,), 0, N, jnp.int32),
         jax.random.randint(k_dst, (E,), 0, N, jnp.int32)], axis=0)
    edge_weights = jax.random.normal(k_w, (E, EDGES_DIM), jnp.float32)

    # Parameters exist to mirror __init__ but are unused by the forward (dead code in ref).
    _params = init_graphsage_e_params(k_p, D, NR_LAYERS)

    out = graphsage_e_forward(x, edge_index, edge_weights, nr_layers=NR_LAYERS)
    out = jax.block_until_ready(out)

    ref = graphsage_e_reference(x, edge_index, edge_weights, NR_LAYERS)

    assert out.shape == (N, D) and out.dtype == jnp.float32
    assert bool(jnp.all(jnp.isfinite(out))) and bool(jnp.all(out >= 0.0))
    max_err = float(jnp.max(jnp.abs(out - ref)))
    assert max_err < 0.1, f"mismatch vs reference: max abs err = {max_err}"  # loose: bf16 MXU inputs
    print("KERNEL_OK")
</pallas_src>

<mosaic_0001>
module attributes {stable_mosaic.version = 11 : i64} {
  func.func private @main(%arg0: i32) attributes {dimension_semantics = [#tpu.dimension_semantics<core_parallel>], iteration_bounds = array<i64: 2>, tpu.core_type = #tpu.core_type<sc_scalar_subcore>, window_params = []} {
    return
  }
}

module attributes {stable_mosaic.version = 11 : i64} {
  func.func private @main(%arg0: i32) attributes {dimension_semantics = [#tpu.dimension_semantics<core_parallel>], iteration_bounds = array<i64: 2>, tpu.core_type = #tpu.core_type<sc_scalar_subcore>, window_params = []} {
    return
  }
}

module attributes {stable_mosaic.version = 11 : i64} {
  func.func @_sage_layer_kernel(%arg0: i32, %arg1: i32, %arg2: memref<256x256xbf16, #tpu.memory_space<vmem>>, %arg3: memref<256x128xbf16, #tpu.memory_space<vmem>>, %arg4: memref<256x1xf32, #tpu.memory_space<vmem>>, %arg5: memref<256x128xbf16, #tpu.memory_space<vmem>>, %arg6: memref<256x128xf32, #tpu.memory_space<vmem>>) attributes {dimension_semantics = [#tpu.dimension_semantics<parallel>, #tpu.dimension_semantics<arbitrary>], iteration_bounds = array<i64: 1, 1>, scalar_prefetch = 0 : i64, scratch_operands = 1 : i64, tpu.core_type = #tpu.core_type<tc>, window_params = [{transform_indices = @transform_0, window_bounds = array<i64: 256, 256>}, {transform_indices = @transform_1, window_bounds = array<i64: 256, 128>}, {transform_indices = @transform_2, window_bounds = array<i64: 256, 1>}, {transform_indices = @transform_3, window_bounds = array<i64: 256, 128>}]} {
    %c0_i32 = arith.constant 0 : i32
    %0 = arith.cmpi eq, %arg1, %c0_i32 : i32
    %1 = arith.extui %0 : i1 to i32
    %c0_i32_0 = arith.constant 0 : i32
    %2 = arith.cmpi ne, %1, %c0_i32_0 : i32
    scf.if %2 {
      %cst_10 = arith.constant 0.000000e+00 : f32
      %12 = vector.broadcast %cst_10 : f32 to vector<256x128xf32>
      %c0_11 = arith.constant 0 : index
      %c0_12 = arith.constant 0 : index
      %13 = vector.load %arg6[%c0_11, %c0_12] : memref<256x128xf32, #tpu.memory_space<vmem>>, vector<256x128xf32>
      tpu.vector_store %arg6[%c0_11, %c0_12], %12 {strides = array<i32>} : memref<256x128xf32, #tpu.memory_space<vmem>>, vector<256x128xf32>,
    } else {
    }
    %c0 = arith.constant 0 : index
    %c0_1 = arith.constant 0 : index
    %3 = vector.load %arg6[%c0, %c0_1] : memref<256x128xf32, #tpu.memory_space<vmem>>, vector<256x128xf32>
    %c0_2 = arith.constant 0 : index
    %c0_3 = arith.constant 0 : index
    %4 = vector.load %arg2[%c0_2, %c0_3] : memref<256x256xbf16, #tpu.memory_space<vmem>>, vector<256x256xbf16>
    %c0_4 = arith.constant 0 : index
    %c0_5 = arith.constant 0 : index
    %5 = vector.load %arg3[%c0_4, %c0_5] : memref<256x128xbf16, #tpu.memory_space<vmem>>, vector<256x128xbf16>
    %cst = arith.constant dense<0.000000e+00> : vector<256x128xf32>
    %6 = tpu.matmul %4, %5, %cst {dimension_numbers = #tpu.dot_dimension_numbers<[1], [0], [0], [1], [0, 0, 1, 1], [], []>} : vector<256x256xbf16>, vector<256x128xbf16>, vector<256x128xf32> -> vector<256x128xf32>
    %7 = arith.addf %3, %6 : vector<256x128xf32>
    %c0_6 = arith.constant 0 : index
    %c0_7 = arith.constant 0 : index
    %8 = vector.load %arg6[%c0_6, %c0_7] : memref<256x128xf32, #tpu.memory_space<vmem>>, vector<256x128xf32>
    tpu.vector_store %arg6[%c0_6, %c0_7], %7 {strides = array<i32>} : memref<256x128xf32, #tpu.memory_space<vmem>>, vector<256x128xf32>,
    %c0_i32_8 = arith.constant 0 : i32
    %9 = arith.cmpi eq, %arg1, %c0_i32_8 : i32
    %10 = arith.extui %9 : i1 to i32
    %c0_i32_9 = arith.constant 0 : i32
    %11 = arith.cmpi ne, %10, %c0_i32_9 : i32
    scf.if %11 {
      %12 = tpu.iota {dimensions = array<i32: 1>} : vector<1x128xi32>
      %c32_i32 = arith.constant 32 : i32
      %13 = vector.broadcast %c32_i32 : i32 to vector<1x128xi32>
      %14 = arith.cmpi slt, %12, %13 : vector<1x128xi32>
      %15 = arith.extui %14 : vector<1x128xi1> to vector<1x128xi32>
      %16 = arith.sitofp %15 : vector<1x128xi32> to vector<1x128xf32>
      %c0_10 = arith.constant 0 : index
      %c0_11 = arith.constant 0 : index
      %17 = vector.load %arg6[%c0_10, %c0_11] : memref<256x128xf32, #tpu.memory_space<vmem>>, vector<256x128xf32>
      %c0_12 = arith.constant 0 : index
      %c0_13 = arith.constant 0 : index
      %18 = vector.load %arg4[%c0_12, %c0_13] : memref<256x1xf32, #tpu.memory_space<vmem>>, vector<256x1xf32>
      %19 = vector.broadcast %18 : vector<256x1xf32> to vector<256x128xf32>
      %20 = vector.broadcast %16 : vector<1x128xf32> to vector<256x128xf32>
      %21 = arith.mulf %19, %20 : vector<256x128xf32>
      %22 = arith.addf %17, %21 : vector<256x128xf32>
      %23 = arith.mulf %22, %22 : vector<256x128xf32>
      %cst_14 = arith.constant dense<0.000000e+00> : vector<256xf32>
      %24 = vector.multi_reduction <add>, %23, %cst_14 [1] : vector<256x128xf32> to vector<256xf32>
      %25 = vector.shape_cast %24 : vector<256xf32> to vector<256x1xf32>
      %cst_15 = arith.constant 1.000000e-24 : f32
      %26 = vector.broadcast %cst_15 : f32 to vector<256x1xf32>
      %27 = arith.maximumf %25, %26 : vector<256x1xf32>
      %28 = math.rsqrt %27 : vector<256x1xf32>
      %cst_16 = arith.constant 2.000000e+00 : f32
      %29 = vector.broadcast %cst_16 : f32 to vector<256x1xf32>
      %30 = arith.mulf %29, %28 : vector<256x1xf32>
      %31 = vector.broadcast %30 : vector<256x1xf32> to vector<256x128xf32>
      %32 = arith.mulf %22, %31 : vector<256x128xf32>
      %cst_17 = arith.constant 0.000000e+00 : f32
      %33 = vector.broadcast %cst_17 : f32 to vector<256x128xf32>
      %34 = arith.maximumf %32, %33 : vector<256x128xf32>
      %35 = arith.truncf %34 : vector<256x128xf32> to vector<256x128xbf16>
      %c0_18 = arith.constant 0 : index
      %c0_19 = arith.constant 0 : index
      %36 = vector.load %arg5[%c0_18, %c0_19] : memref<256x128xbf16, #tpu.memory_space<vmem>>, vector<256x128xbf16>
      tpu.vector_store %arg5[%c0_18, %c0_19], %35 {strides = array<i32>} : memref<256x128xbf16, #tpu.memory_space<vmem>>, vector<256x128xbf16>,
    } else {
    }
    return
  }
  func.func @transform_0(%arg0: i32, %arg1: i32) -> (i32, i32) {
    %c0_i32 = arith.constant 0 : i32
    return %arg0, %arg1 : i32, i32
  }
  func.func @transform_1(%arg0: i32, %arg1: i32) -> (i32, i32) {
    %c0_i32 = arith.constant 0 : i32
    %c0_i32_0 = arith.constant 0 : i32
    return %arg1, %c0_i32 : i32, i32
  }
  func.func @transform_2(%arg0: i32, %arg1: i32) -> (i32, i32) {
    %c0_i32 = arith.constant 0 : i32
    %c0_i32_0 = arith.constant 0 : i32
    return %arg0, %c0_i32 : i32, i32
  }
  func.func @transform_3(%arg0: i32, %arg1: i32) -> (i32, i32) {
    %c0_i32 = arith.constant 0 : i32
    %c0_i32_0 = arith.constant 0 : i32
    return %arg0, %c0_i32 : i32, i32
  }
}

module attributes {stable_mosaic.version = 11 : i64} {
  func.func @_sage_layer_kernel(%arg0: i32, %arg1: i32, %arg2: memref<256x256xbf16, #tpu.memory_space<vmem>>, %arg3: memref<256x128xbf16, #tpu.memory_space<vmem>>, %arg4: memref<256x1xf32, #tpu.memory_space<vmem>>, %arg5: memref<256x128xf32, #tpu.memory_space<vmem>>, %arg6: memref<256x128xf32, #tpu.memory_space<vmem>>) attributes {dimension_semantics = [#tpu.dimension_semantics<parallel>, #tpu.dimension_semantics<arbitrary>], iteration_bounds = array<i64: 1, 1>, scalar_prefetch = 0 : i64, scratch_operands = 1 : i64, tpu.core_type = #tpu.core_type<tc>, window_params = [{transform_indices = @transform_0, window_bounds = array<i64: 256, 256>}, {transform_indices = @transform_1, window_bounds = array<i64: 256, 128>}, {transform_indices = @transform_2, window_bounds = array<i64: 256, 1>}, {transform_indices = @transform_3, window_bounds = array<i64: 256, 128>}]} {
    %c0_i32 = arith.constant 0 : i32
    %0 = arith.cmpi eq, %arg1, %c0_i32 : i32
    %1 = arith.extui %0 : i1 to i32
    %c0_i32_0 = arith.constant 0 : i32
    %2 = arith.cmpi ne, %1, %c0_i32_0 : i32
    scf.if %2 {
      %cst_10 = arith.constant 0.000000e+00 : f32
      %12 = vector.broadcast %cst_10 : f32 to vector<256x128xf32>
      %c0_11 = arith.constant 0 : index
      %c0_12 = arith.constant 0 : index
      %13 = vector.load %arg6[%c0_11, %c0_12] : memref<256x128xf32, #tpu.memory_space<vmem>>, vector<256x128xf32>
      tpu.vector_store %arg6[%c0_11, %c0_12], %12 {strides = array<i32>} : memref<256x128xf32, #tpu.memory_space<vmem>>, vector<256x128xf32>,
    } else {
    }
    %c0 = arith.constant 0 : index
    %c0_1 = arith.constant 0 : index
    %3 = vector.load %arg6[%c0, %c0_1] : memref<256x128xf32, #tpu.memory_space<vmem>>, vector<256x128xf32>
    %c0_2 = arith.constant 0 : index
    %c0_3 = arith.constant 0 : index
    %4 = vector.load %arg2[%c0_2, %c0_3] : memref<256x256xbf16, #tpu.memory_space<vmem>>, vector<256x256xbf16>
    %c0_4 = arith.constant 0 : index
    %c0_5 = arith.constant 0 : index
    %5 = vector.load %arg3[%c0_4, %c0_5] : memref<256x128xbf16, #tpu.memory_space<vmem>>, vector<256x128xbf16>
    %cst = arith.constant dense<0.000000e+00> : vector<256x128xf32>
    %6 = tpu.matmul %4, %5, %cst {dimension_numbers = #tpu.dot_dimension_numbers<[1], [0], [0], [1], [0, 0, 1, 1], [], []>} : vector<256x256xbf16>, vector<256x128xbf16>, vector<256x128xf32> -> vector<256x128xf32>
    %7 = arith.addf %3, %6 : vector<256x128xf32>
    %c0_6 = arith.constant 0 : index
    %c0_7 = arith.constant 0 : index
    %8 = vector.load %arg6[%c0_6, %c0_7] : memref<256x128xf32, #tpu.memory_space<vmem>>, vector<256x128xf32>
    tpu.vector_store %arg6[%c0_6, %c0_7], %7 {strides = array<i32>} : memref<256x128xf32, #tpu.memory_space<vmem>>, vector<256x128xf32>,
    %c0_i32_8 = arith.constant 0 : i32
    %9 = arith.cmpi eq, %arg1, %c0_i32_8 : i32
    %10 = arith.extui %9 : i1 to i32
    %c0_i32_9 = arith.constant 0 : i32
    %11 = arith.cmpi ne, %10, %c0_i32_9 : i32
    scf.if %11 {
      %12 = tpu.iota {dimensions = array<i32: 1>} : vector<1x128xi32>
      %c32_i32 = arith.constant 32 : i32
      %13 = vector.broadcast %c32_i32 : i32 to vector<1x128xi32>
      %14 = arith.cmpi slt, %12, %13 : vector<1x128xi32>
      %15 = arith.extui %14 : vector<1x128xi1> to vector<1x128xi32>
      %16 = arith.sitofp %15 : vector<1x128xi32> to vector<1x128xf32>
      %c0_10 = arith.constant 0 : index
      %c0_11 = arith.constant 0 : index
      %17 = vector.load %arg6[%c0_10, %c0_11] : memref<256x128xf32, #tpu.memory_space<vmem>>, vector<256x128xf32>
      %c0_12 = arith.constant 0 : index
      %c0_13 = arith.constant 0 : index
      %18 = vector.load %arg4[%c0_12, %c0_13] : memref<256x1xf32, #tpu.memory_space<vmem>>, vector<256x1xf32>
      %19 = vector.broadcast %18 : vector<256x1xf32> to vector<256x128xf32>
      %20 = vector.broadcast %16 : vector<1x128xf32> to vector<256x128xf32>
      %21 = arith.mulf %19, %20 : vector<256x128xf32>
      %22 = arith.addf %17, %21 : vector<256x128xf32>
      %23 = arith.mulf %22, %22 : vector<256x128xf32>
      %cst_14 = arith.constant dense<0.000000e+00> : vector<256xf32>
      %24 = vector.multi_reduction <add>, %23, %cst_14 [1] : vector<256x128xf32> to vector<256xf32>
      %25 = vector.shape_cast %24 : vector<256xf32> to vector<256x1xf32>
      %cst_15 = arith.constant 1.000000e-24 : f32
      %26 = vector.broadcast %cst_15 : f32 to vector<256x1xf32>
      %27 = arith.maximumf %25, %26 : vector<256x1xf32>
      %28 = math.rsqrt %27 : vector<256x1xf32>
      %cst_16 = arith.constant 2.000000e+00 : f32
      %29 = vector.broadcast %cst_16 : f32 to vector<256x1xf32>
      %30 = arith.mulf %29, %28 : vector<256x1xf32>
      %31 = vector.broadcast %30 : vector<256x1xf32> to vector<256x128xf32>
      %32 = arith.mulf %22, %31 : vector<256x128xf32>
      %cst_17 = arith.constant 0.000000e+00 : f32
      %33 = vector.broadcast %cst_17 : f32 to vector<256x128xf32>
      %34 = arith.maximumf %32, %33 : vector<256x128xf32>
      %c0_18 = arith.constant 0 : index
      %c0_19 = arith.constant 0 : index
      %35 = vector.load %arg5[%c0_18, %c0_19] : memref<256x128xf32, #tpu.memory_space<vmem>>, vector<256x128xf32>
      tpu.vector_store %arg5[%c0_18, %c0_19], %34 {strides = array<i32>} : memref<256x128xf32, #tpu.memory_space<vmem>>, vector<256x128xf32>,
    } else {
    }
    return
  }
  func.func @transform_0(%arg0: i32, %arg1: i32) -> (i32, i32) {
    %c0_i32 = arith.constant 0 : i32
    return %arg0, %arg1 : i32, i32
  }
  func.func @transform_1(%arg0: i32, %arg1: i32) -> (i32, i32) {
    %c0_i32 = arith.constant 0 : i32
    %c0_i32_0 = arith.constant 0 : i32
    return %arg1, %c0_i32 : i32, i32
  }
  func.func @transform_2(%arg0: i32, %arg1: i32) -> (i32, i32) {
    %c0_i32 = arith.constant 0 : i32
    %c0_i32_0 = arith.constant 0 : i32
    return %arg0, %c0_i32 : i32, i32
  }
  func.func @transform_3(%arg0: i32, %arg1: i32) -> (i32, i32) {
    %c0_i32 = arith.constant 0 : i32
    %c0_i32_0 = arith.constant 0 : i32
    return %arg0, %c0_i32 : i32, i32
  }
}

</mosaic_0001>

<llo_original>
// kernel: graphsage_e_forward.2
$region0: #{graphsage_e_forward.2}
  #allocation0 [shape = 'u32[]', space=smem, size = 0x4, offset = 0x4, fixed_abs, tag = 'smem constant byte address 0x4 - core index']
  #allocation1 [shape = 'u32[144,128]{1,0:T(1,128)}', space=vmem, size = 0x12000, scoped, tag = 'internal scratch']
  #allocation2 [shape = 'f32[256,128]{1,0:T(8,128)}', space=vmem, size = 0x20000, scoped, tag = 'scratch operand']
  %s0 = inlined_call_operand.vmem [shape: bf16[256,256], index: 0, kind: input, shape index: {}]
  %s1 = inlined_call_operand.vmem [shape: bf16[256,128], index: 1, kind: input, shape index: {}]
  %s2 = inlined_call_operand.vmem [shape: f32[256,1], index: 2, kind: input, shape index: {}]
  %s3 = inlined_call_operand.vmem [shape: bf16[256,128], index: 3, kind: output, shape index: {}]
  %s4 = sld [smem:[#allocation0]]
  $region30: #{graphsage_e_forward.2} parent=0
    _
  %s6 = ssub.s32 1, %s4
  %s7 = scalar_select 0, %s6, %s4
  // Predicated region
  $region2: #{graphsage_e_forward.2} parent=0 // pred_check
    _
  $region3: #{graphsage_e_forward.2} parent=0 // pred_check_branch
    %9 = sbr.rel (0) target = $region5
  $region4: #{graphsage_e_forward.2} parent=0 // pred_region
    _
  $region5: #{graphsage_e_forward.2} parent=0 // pred_fallthru
    _
  // Predicated region
  $region6: #{graphsage_e_forward.2} parent=0 // pred_check
    _
  $region7: #{graphsage_e_forward.2} parent=0 // pred_check_branch
    %11 = sbr.rel (0) target = $region9
  $region8: #{graphsage_e_forward.2} parent=0 // pred_region
    _
  $region9: #{graphsage_e_forward.2} parent=0 // pred_fallthru
    _
  // Predicated region
  $region10: #{graphsage_e_forward.2} parent=0 // pred_check
    _
  $region11: #{graphsage_e_forward.2} parent=0 // pred_check_branch
    %13 = sbr.rel (0) target = $region13
  $region12: #{graphsage_e_forward.2} parent=0 // pred_region
    _
  $region13: #{graphsage_e_forward.2} parent=0 // pred_fallthru
    _
  %p15 = scmp.eq.s32.totalorder 0, 0
  // Predicated region
  $region14: #{graphsage_e_forward.2} parent=0 // pred_check
    %p16 = pneg %p15
  $region15: #{graphsage_e_forward.2} parent=0 // pred_check_branch
    %18 = sbr.rel (%p16) target = $region17
  $region16: #{graphsage_e_forward.2} parent=0 // pred_region
    %19 = vst [vmem:[#allocation2] sm:$0xff] 0.0
    %20 = vst [vmem:[#allocation2 + $0x8] sm:$0xff] 0.0
    %21 = vst [vmem:[#allocation2 + $0x10] sm:$0xff] 0.0
    %22 = vst [vmem:[#allocation2 + $0x18] sm:$0xff] 0.0
    %23 = vst [vmem:[#allocation2 + $0x20] sm:$0xff] 0.0
    %24 = vst [vmem:[#allocation2 + $0x28] sm:$0xff] 0.0
    %25 = vst [vmem:[#allocation2 + $0x30] sm:$0xff] 0.0
    %26 = vst [vmem:[#allocation2 + $0x38] sm:$0xff] 0.0
    %27 = vst [vmem:[#allocation2 + $0x40] sm:$0xff] 0.0
    %28 = vst [vmem:[#allocation2 + $0x48] sm:$0xff] 0.0
    %29 = vst [vmem:[#allocation2 + $0x50] sm:$0xff] 0.0
    %30 = vst [vmem:[#allocation2 + $0x58] sm:$0xff] 0.0
    %31 = vst [vmem:[#allocation2 + $0x60] sm:$0xff] 0.0
    %32 = vst [vmem:[#allocation2 + $0x68] sm:$0xff] 0.0
    %33 = vst [vmem:[#allocation2 + $0x70] sm:$0xff] 0.0
    %34 = vst [vmem:[#allocation2 + $0x78] sm:$0xff] 0.0
    %35 = vst [vmem:[#allocation2 + $0x80] sm:$0xff] 0.0
    %36 = vst [vmem:[#allocation2 + $0x88] sm:$0xff] 0.0
    %37 = vst [vmem:[#allocation2 + $0x90] sm:$0xff] 0.0
    %38 = vst [vmem:[#allocation2 + $0x98] sm:$0xff] 0.0
    %39 = vst [vmem:[#allocation2 + $0xa0] sm:$0xff] 0.0
    %40 = vst [vmem:[#allocation2 + $0xa8] sm:$0xff] 0.0
    %41 = vst [vmem:[#allocation2 + $0xb0] sm:$0xff] 0.0
    %42 = vst [vmem:[#allocation2 + $0xb8] sm:$0xff] 0.0
    %43 = vst [vmem:[#allocation2 + $0xc0] sm:$0xff] 0.0
    %44 = vst [vmem:[#allocation2 + $0xc8] sm:$0xff] 0.0
    %45 = vst [vmem:[#allocation2 + $0xd0] sm:$0xff] 0.0
    %46 = vst [vmem:[#allocation2 + $0xd8] sm:$0xff] 0.0
    %47 = vst [vmem:[#allocation2 + $0xe0] sm:$0xff] 0.0
    %48 = vst [vmem:[#allocation2 + $0xe8] sm:$0xff] 0.0
    %49 = vst [vmem:[#allocation2 + $0xf0] sm:$0xff] 0.0
    %50 = vst [vmem:[#allocation2 + $0xf8] sm:$0xff] 0.0
  $region17: #{graphsage_e_forward.2} parent=0 // pred_fallthru
    _
  %v51 = vld [vmem:[#allocation2] sm:$0xff]
  %v52 = vld [vmem:[#allocation2 + $0x8] sm:$0xff]
  %v53 = vld [vmem:[#allocation2 + $0x10] sm:$0xff]
  %v54 = vld [vmem:[#allocation2 + $0x18] sm:$0xff]
  %v55 = vld [vmem:[#allocation2 + $0x20] sm:$0xff]
  %v56 = vld [vmem:[#allocation2 + $0x28] sm:$0xff]
  %v57 = vld [vmem:[#allocation2 + $0x30] sm:$0xff]
  %v58 = vld [vmem:[#allocation2 + $0x38] sm:$0xff]
  %v59 = vld [vmem:[#allocation2 + $0x40] sm:$0xff]
  %v60 = vld [vmem:[#allocation2 + $0x48] sm:$0xff]
  %v61 = vld [vmem:[#allocation2 + $0x50] sm:$0xff]
  %v62 = vld [vmem:[#allocation2 + $0x58] sm:$0xff]
  %v63 = vld [vmem:[#allocation2 + $0x60] sm:$0xff]
  %v64 = vld [vmem:[#allocation2 + $0x68] sm:$0xff]
  %v65 = vld [vmem:[#allocation2 + $0x70] sm:$0xff]
  %v66 = vld [vmem:[#allocation2 + $0x78] sm:$0xff]
  %v67 = vld [vmem:[#allocation2 + $0x80] sm:$0xff]
  %v68 = vld [vmem:[#allocation2 + $0x88] sm:$0xff]
  %v69 = vld [vmem:[#allocation2 + $0x90] sm:$0xff]
  %v70 = vld [vmem:[#allocation2 + $0x98] sm:$0xff]
  %v71 = vld [vmem:[#allocation2 + $0xa0] sm:$0xff]
  %v72 = vld [vmem:[#allocation2 + $0xa8] sm:$0xff]
  %v73 = vld [vmem:[#allocation2 + $0xb0] sm:$0xff]
  %v74 = vld [vmem:[#allocation2 + $0xb8] sm:$0xff]
  %v75 = vld [vmem:[#allocation2 + $0xc0] sm:$0xff]
  %v76 = vld [vmem:[#allocation2 + $0xc8] sm:$0xff]
  %v77 = vld [vmem:[#allocation2 + $0xd0] sm:$0xff]
  %v78 = vld [vmem:[#allocation2 + $0xd8] sm:$0xff]
  %v79 = vld [vmem:[#allocation2 + $0xe0] sm:$0xff]
  %v80 = vld [vmem:[#allocation2 + $0xe8] sm:$0xff]
  %v81 = vld [vmem:[#allocation2 + $0xf0] sm:$0xff]
  %v82 = vld [vmem:[#allocation2 + $0xf8] sm:$0xff]
  %v83 = vld [vmem:[%s0] sm:$0xff]
  %v84 = vld [vmem:[%s0 + $0x8] sm:$0xff]
  %v85 = vld [vmem:[%s0 + $0x10] sm:$0xff]
  %v86 = vld [vmem:[%s0 + $0x18] sm:$0xff]
  %v87 = vld [vmem:[%s0 + $0x20] sm:$0xff]
  %v88 = vld [vmem:[%s0 + $0x28] sm:$0xff]
  %v89 = vld [vmem:[%s0 + $0x30] sm:$0xff]
  %v90 = vld [vmem:[%s0 + $0x38] sm:$0xff]
  %v91 = vld [vmem:[%s0 + $0x40] sm:$0xff]
  %v92 = vld [vmem:[%s0 + $0x48] sm:$0xff]
  %v93 = vld [vmem:[%s0 + $0x50] sm:$0xff]
  %v94 = vld [vmem:[%s0 + $0x58] sm:$0xff]
  %v95 = vld [vmem:[%s0 + $0x60] sm:$0xff]
  %v96 = vld [vmem:[%s0 + $0x68] sm:$0xff]
  %v97 = vld [vmem:[%s0 + $0x70] sm:$0xff]
  %v98 = vld [vmem:[%s0 + $0x78] sm:$0xff]
  %v99 = vld [vmem:[%s0 + $0x80] sm:$0xff]
  %v100 = vld [vmem:[%s0 + $0x88] sm:$0xff]
  %v101 = vld [vmem:[%s0 + $0x90] sm:$0xff]
  %v102 = vld [vmem:[%s0 + $0x98] sm:$0xff]
  %v103 = vld [vmem:[%s0 + $0xa0] sm:$0xff]
  %v104 = vld [vmem:[%s0 + $0xa8] sm:$0xff]
  %v105 = vld [vmem:[%s0 + $0xb0] sm:$0xff]
  %v106 = vld [vmem:[%s0 + $0xb8] sm:$0xff]
  %v107 = vld [vmem:[%s0 + $0xc0] sm:$0xff]
  %v108 = vld [vmem:[%s0 + $0xc8] sm:$0xff]
  %v109 = vld [vmem:[%s0 + $0xd0] sm:$0xff]
  %v110 = vld [vmem:[%s0 + $0xd8] sm:$0xff]
  %v111 = vld [vmem:[%s0 + $0xe0] sm:$0xff]
  %v112 = vld [vmem:[%s0 + $0xe8] sm:$0xff]
  %v113 = vld [vmem:[%s0 + $0xf0] sm:$0xff]
  %v114 = vld [vmem:[%s0 + $0xf8] sm:$0xff]
  %v115 = vld [vmem:[%s1] sm:$0xf]
  %v116 = vld [vmem:[%s1 + $0x4] sm:$0xf]
  %v117 = vld [vmem:[%s1 + $0x8] sm:$0xf]
  %v118 = vld [vmem:[%s1 + $0xc] sm:$0xf]
  %v119 = vld [vmem:[%s1 + $0x10] sm:$0xf]
  %v120 = vld [vmem:[%s1 + $0x14] sm:$0xf]
  %v121 = vld [vmem:[%s1 + $0x18] sm:$0xf]
  %v122 = vld [vmem:[%s1 + $0x1c] sm:$0xf]
  %v123 = vld [vmem:[%s1 + $0x20] sm:$0xf]
  %v124 = vld [vmem:[%s1 + $0x24] sm:$0xf]
  %v125 = vld [vmem:[%s1 + $0x28] sm:$0xf]
  %v126 = vld [vmem:[%s1 + $0x2c] sm:$0xf]
  %v127 = vld [vmem:[%s1 + $0x30] sm:$0xf]
  %v128 = vld [vmem:[%s1 + $0x34] sm:$0xf]
  %v129 = vld [vmem:[%s1 + $0x38] sm:$0xf]
  %v130 = vld [vmem:[%s1 + $0x3c] sm:$0xf]
  %v131 = vld [vmem:[%s1 + $0x40] sm:$0xf]
  %v132 = vld [vmem:[%s1 + $0x44] sm:$0xf]
  %v133 = vld [vmem:[%s1 + $0x48] sm:$0xf]
  %v134 = vld [vmem:[%s1 + $0x4c] sm:$0xf]
  %v135 = vld [vmem:[%s1 + $0x50] sm:$0xf]
  %v136 = vld [vmem:[%s1 + $0x54] sm:$0xf]
  %v137 = vld [vmem:[%s1 + $0x58] sm:$0xf]
  %v138 = vld [vmem:[%s1 + $0x5c] sm:$0xf]
  %v139 = vld [vmem:[%s1 + $0x60] sm:$0xf]
  %v140 = vld [vmem:[%s1 + $0x64] sm:$0xf]
  %v141 = vld [vmem:[%s1 + $0x68] sm:$0xf]
  %v142 = vld [vmem:[%s1 + $0x6c] sm:$0xf]
  %v143 = vld [vmem:[%s1 + $0x70] sm:$0xf]
  %v144 = vld [vmem:[%s1 + $0x74] sm:$0xf]
  %v145 = vld [vmem:[%s1 + $0x78] sm:$0xf]
  %v146 = vld [vmem:[%s1 + $0x7c] sm:$0xf]
  %v179 = vunpack.c.l.b16 %v83
  %v180 = vunpack.c.h.b16 %v83
  %v181 = vunpack.c.l.b16 %v84
  %v182 = vunpack.c.h.b16 %v84
  %v183 = vunpack.c.l.b16 %v85
  %v184 = vunpack.c.h.b16 %v85
  %v185 = vunpack.c.l.b16 %v86
  %v186 = vunpack.c.h.b16 %v86
  %v187 = vunpack.c.l.b16 %v87
  %v188 = vunpack.c.h.b16 %v87
  %v189 = vunpack.c.l.b16 %v88
  %v190 = vunpack.c.h.b16 %v88
  %v191 = vunpack.c.l.b16 %v89
  %v192 = vunpack.c.h.b16 %v89
  %v193 = vunpack.c.l.b16 %v90
  %v194 = vunpack.c.h.b16 %v90
  %v195 = vunpack.c.l.b16 %v91
  %v196 = vunpack.c.h.b16 %v91
  %v197 = vunpack.c.l.b16 %v92
  %v198 = vunpack.c.h.b16 %v92
  %v199 = vunpack.c.l.b16 %v93
  %v200 = vunpack.c.h.b16 %v93
  %v201 = vunpack.c.l.b16 %v94
  %v202 = vunpack.c.h.b16 %v94
  %v203 = vunpack.c.l.b16 %v95
  %v204 = vunpack.c.h.b16 %v95
  %v205 = vunpack.c.l.b16 %v96
  %v206 = vunpack.c.h.b16 %v96
  %v207 = vunpack.c.l.b16 %v97
  %v208 = vunpack.c.h.b16 %v97
  %v209 = vunpack.c.l.b16 %v98
  %v210 = vunpack.c.h.b16 %v98
  %v211 = vunpack.c.l.b16 %v99
  %v212 = vunpack.c.h.b16 %v99
  %v213 = vunpack.c.l.b16 %v100
  %v214 = vunpack.c.h.b16 %v100
  %v215 = vunpack.c.l.b16 %v101
  %v216 = vunpack.c.h.b16 %v101
  %v217 = vunpack.c.l.b16 %v102
  %v218 = vunpack.c.h.b16 %v102
  %v219 = vunpack.c.l.b16 %v103
  %v220 = vunpack.c.h.b16 %v103
  %v221 = vunpack.c.l.b16 %v104
  %v222 = vunpack.c.h.b16 %v104
  %v223 = vunpack.c.l.b16 %v105
  %v224 = vunpack.c.h.b16 %v105
  %v225 = vunpack.c.l.b16 %v106
  %v226 = vunpack.c.h.b16 %v106
  %v227 = vunpack.c.l.b16 %v107
  %v228 = vunpack.c.h.b16 %v107
  %v229 = vunpack.c.l.b16 %v108
  %v230 = vunpack.c.h.b16 %v108
  %v231 = vunpack.c.l.b16 %v109
  %v232 = vunpack.c.h.b16 %v109
  %v233 = vunpack.c.l.b16 %v110
  %v234 = vunpack.c.h.b16 %v110
  %v235 = vunpack.c.l.b16 %v111
  %v236 = vunpack.c.h.b16 %v111
  %v237 = vunpack.c.l.b16 %v112
  %v238 = vunpack.c.h.b16 %v112
  %v239 = vunpack.c.l.b16 %v113
  %v240 = vunpack.c.h.b16 %v113
  %v241 = vunpack.c.l.b16 %v114
  %v242 = vunpack.c.h.b16 %v114
  %v243 = vpack.c.b16 %v181, %v179
  %v244 = vpack.c.b16 %v182, %v180
  %v245 = vpack.c.b16 %v185, %v183
  %v246 = vpack.c.b16 %v186, %v184
  %v247 = vpack.c.b16 %v189, %v187
  %v248 = vpack.c.b16 %v190, %v188
  %v249 = vpack.c.b16 %v193, %v191
  %v250 = vpack.c.b16 %v194, %v192
  %v251 = vpack.c.b16 %v197, %v195
  %v252 = vpack.c.b16 %v198, %v196
  %v253 = vpack.c.b16 %v201, %v199
  %v254 = vpack.c.b16 %v202, %v200
  %v255 = vpack.c.b16 %v205, %v203
  %v256 = vpack.c.b16 %v206, %v204
  %v257 = vpack.c.b16 %v209, %v207
  %v258 = vpack.c.b16 %v210, %v208
  %v259 = vpack.c.b16 %v213, %v211
  %v260 = vpack.c.b16 %v214, %v212
  %v261 = vpack.c.b16 %v217, %v215
  %v262 = vpack.c.b16 %v218, %v216
  %v263 = vpack.c.b16 %v221, %v219
  %v264 = vpack.c.b16 %v222, %v220
  %v265 = vpack.c.b16 %v225, %v223
  %v266 = vpack.c.b16 %v226, %v224
  %v267 = vpack.c.b16 %v229, %v227
  %v268 = vpack.c.b16 %v230, %v228
  %v269 = vpack.c.b16 %v233, %v231
  %v270 = vpack.c.b16 %v234, %v232
  %v271 = vpack.c.b16 %v237, %v235
  %v272 = vpack.c.b16 %v238, %v236
  %v273 = vpack.c.b16 %v241, %v239
  %v274 = vpack.c.b16 %v242, %v240
  %v339 = vunpack.c.l.b16 %v115
  %v340 = vunpack.c.l.b16 %v116
  %v341 = vunpack.c.l.b16 %v117
  %v342 = vunpack.c.l.b16 %v118
  %v343 = vunpack.c.l.b16 %v119
  %v344 = vunpack.c.l.b16 %v120
  %v345 = vunpack.c.l.b16 %v121
  %v346 = vunpack.c.l.b16 %v122
  %v347 = vunpack.c.l.b16 %v123
  %v348 = vunpack.c.l.b16 %v124
  %v349 = vunpack.c.l.b16 %v125
  %v350 = vunpack.c.l.b16 %v126
  %v351 = vunpack.c.l.b16 %v127
  %v352 = vunpack.c.l.b16 %v128
  %v353 = vunpack.c.l.b16 %v129
  %v354 = vunpack.c.l.b16 %v130
  %v355 = vunpack.c.l.b16 %v131
  %v356 = vunpack.c.l.b16 %v132
  %v357 = vunpack.c.l.b16 %v133
  %v358 = vunpack.c.l.b16 %v134
  %v359 = vunpack.c.l.b16 %v135
  %v360 = vunpack.c.l.b16 %v136
  %v361 = vunpack.c.l.b16 %v137
  %v362 = vunpack.c.l.b16 %v138
  %v363 = vunpack.c.l.b16 %v139
  %v364 = vunpack.c.l.b16 %v140
  %v365 = vunpack.c.l.b16 %v141
  %v366 = vunpack.c.l.b16 %v142
  %v367 = vunpack.c.l.b16 %v143
  %v368 = vunpack.c.l.b16 %v144
  %v369 = vunpack.c.l.b16 %v145
  %v370 = vunpack.c.l.b16 %v146
  %v371 = vpack.c.b16 %v340, %v339
  %v372 = vpack.c.b16 %v342, %v341
  %v373 = vpack.c.b16 %v344, %v343
  %v374 = vpack.c.b16 %v346, %v345
  %v375 = vpack.c.b16 %v348, %v347
  %v376 = vpack.c.b16 %v350, %v349
  %v377 = vpack.c.b16 %v352, %v351
  %v378 = vpack.c.b16 %v354, %v353
  %v379 = vpack.c.b16 %v356, %v355
  %v380 = vpack.c.b16 %v358, %v357
  %v381 = vpack.c.b16 %v360, %v359
  %v382 = vpack.c.b16 %v362, %v361
  %v383 = vpack.c.b16 %v364, %v363
  %v384 = vpack.c.b16 %v366, %v365
  %v385 = vpack.c.b16 %v368, %v367
  %v386 = vpack.c.b16 %v370, %v369
  %403 = vmatprep.subr.bf16.mxu0 0
  %404 = vmatpush1.bf16.msra.mxu0 %v371
  %405 = vmatprep.subr.bf16.mxu0 0
  %406 = vmatpush1.bf16.msra.mxu0 %v372
  %407 = vmatprep.subr.bf16.mxu0 0
  %408 = vmatpush1.bf16.msra.mxu0 %v373
  %409 = vmatprep.subr.bf16.mxu0 0
  %410 = vmatpush1.bf16.msra.mxu0 %v374
  %411 = vmatprep.subr.bf16.mxu0 0
  %412 = vmatpush1.bf16.msra.mxu0 %v375
  %413 = vmatprep.subr.bf16.mxu0 0
  %414 = vmatpush1.bf16.msra.mxu0 %v376
  %415 = vmatprep.subr.bf16.mxu0 0
  %416 = vmatpush1.bf16.msra.mxu0 %v377
  %417 = vmatprep.subr.bf16.mxu0 0
  %418 = vmatpush1.bf16.msra.mxu0 %v378
  %419 = vmatprep.subr.bf16.mxu0 0
  %420 = vmatpush1.bf16.msra.mxu0 %v379
  %421 = vmatprep.subr.bf16.mxu0 0
  %422 = vmatpush1.bf16.msra.mxu0 %v380
  %423 = vmatprep.subr.bf16.mxu0 0
  %424 = vmatpush1.bf16.msra.mxu0 %v381
  %425 = vmatprep.subr.bf16.mxu0 0
  %426 = vmatpush1.bf16.msra.mxu0 %v382
  %427 = vmatprep.subr.bf16.mxu0 0
  %428 = vmatpush1.bf16.msra.mxu0 %v383
  %429 = vmatprep.subr.bf16.mxu0 0
  %430 = vmatpush1.bf16.msra.mxu0 %v384
  %431 = vmatprep.subr.bf16.mxu0 0
  %432 = vmatpush1.bf16.msra.mxu0 %v385
  %433 = vmatprep.subr.bf16.mxu0 0
  %434 = vmatpush1.bf16.msra.mxu0 %v386
  %435 = vmatprep.mubr.bf16.mxu0 %v244
  %436 = vmatmul.mubr.bf16.gmra.mrb[0].mxu0 %v243
  %v437 = vpop.f32.mrb[0].mxu0
  %v438 = vadd.f32 0.0, %v437
  %v439 = vpop.f32.mrb[0].mxu0
  %v440 = vpop.f32.mrb[0].mxu0
  %v441 = vadd.f32 0.0, %v440
  %v442 = vpop.f32.mrb[0].mxu0
  %443 = vmatprep.mubr.bf16.mxu0 %v246
  %444 = vmatmul.mubr.bf16.gmra.mrb[0].mxu0 %v245
  %v445 = vpop.f32.mrb[0].mxu0
  %v446 = vadd.f32 0.0, %v445
  %v447 = vpop.f32.mrb[0].mxu0
  %v448 = vpop.f32.mrb[0].mxu0
  %v449 = vadd.f32 0.0, %v448
  %v450 = vpop.f32.mrb[0].mxu0
  %451 = vmatprep.mubr.bf16.mxu0 %v248
  %452 = vmatmul.mubr.bf16.gmra.mrb[0].mxu0 %v247
  %v453 = vpop.f32.mrb[0].mxu0
  %v454 = vadd.f32 0.0, %v453
  %v455 = vpop.f32.mrb[0].mxu0
  %v456 = vpop.f32.mrb[0].mxu0
  %v457 = vadd.f32 0.0, %v456
  %v458 = vpop.f32.mrb[0].mxu0
  %459 = vmatprep.mubr.bf16.mxu0 %v250
  %460 = vmatmul.mubr.bf16.gmra.mrb[0].mxu0 %v249
  %v461 = vpop.f32.mrb[0].mxu0
  %v462 = vadd.f32 0.0, %v461
  %v463 = vpop.f32.mrb[0].mxu0
  %v464 = vpop.f32.mrb[0].mxu0
  %v465 = vadd.f32 0.0, %v464
  %v466 = vpop.f32.mrb[0].mxu0
  %467 = vmatprep.mubr.bf16.mxu0 %v252
  %468 = vmatmul.mubr.bf16.gmra.mrb[0].mxu0 %v251
  %v469 = vpop.f32.mrb[0].mxu0
  %v470 = vadd.f32 0.0, %v469
  %v471 = vpop.f32.mrb[0].mxu0
  %v472 = vpop.f32.mrb[0].mxu0
  %v473 = vadd.f32 0.0, %v472
  %v474 = vpop.f32.mrb[0].mxu0
  %475 = vmatprep.mubr.bf16.mxu0 %v254
  %476 = vmatmul.mubr.bf16.gmra.mrb[0].mxu0 %v253
  %v477 = vpop.f32.mrb[0].mxu0
  %v478 = vadd.f32 0.0, %v477
  %v479 = vpop.f32.mrb[0].mxu0
  %v480 = vpop.f32.mrb[0].mxu0
  %v481 = vadd.f32 0.0, %v480
  %v482 = vpop.f32.mrb[0].mxu0
  %483 = vmatprep.mubr.bf16.mxu0 %v256
  %484 = vmatmul.mubr.bf16.gmra.mrb[0].mxu0 %v255
  %v485 = vpop.f32.mrb[0].mxu0
  %v486 = vadd.f32 0.0, %v485
  %v487 = vpop.f32.mrb[0].mxu0
  %v488 = vpop.f32.mrb[0].mxu0
  %v489 = vadd.f32 0.0, %v488
  %v490 = vpop.f32.mrb[0].mxu0
  %491 = vmatprep.mubr.bf16.mxu0 %v258
  %492 = vmatmul.mubr.bf16.gmra.mrb[0].mxu0 %v257
  %v493 = vpop.f32.mrb[0].mxu0
  %v494 = vadd.f32 0.0, %v493
  %v495 = vpop.f32.mrb[0].mxu0
  %v496 = vpop.f32.mrb[0].mxu0
  %v497 = vadd.f32 0.0, %v496
  %v498 = vpop.f32.mrb[0].mxu0
  %499 = vmatprep.mubr.bf16.mxu0 %v260
  %500 = vmatmul.mubr.bf16.gmra.mrb[0].mxu0 %v259
  %v501 = vpop.f32.mrb[0].mxu0
  %v502 = vadd.f32 0.0, %v501
  %v503 = vpop.f32.mrb[0].mxu0
  %v504 = vpop.f32.mrb[0].mxu0
  %v505 = vadd.f32 0.0, %v504
  %v506 = vpop.f32.mrb[0].mxu0
  %507 = vmatprep.mubr.bf16.mxu0 %v262
  %508 = vmatmul.mubr.bf16.gmra.mrb[0].mxu0 %v261
  %v509 = vpop.f32.mrb[0].mxu0
  %v510 = vadd.f32 0.0, %v509
  %v511 = vpop.f32.mrb[0].mxu0
  %v512 = vpop.f32.mrb[0].mxu0
  %v513 = vadd.f32 0.0, %v512
  %v514 = vpop.f32.mrb[0].mxu0
  %515 = vmatprep.mubr.bf16.mxu0 %v264
  %516 = vmatmul.mubr.bf16.gmra.mrb[0].mxu0 %v263
  %v517 = vpop.f32.mrb[0].mxu0
  %v518 = vadd.f32 0.0, %v517
  %v519 = vpop.f32.mrb[0].mxu0
  %v520 = vpop.f32.mrb[0].mxu0
  %v521 = vadd.f32 0.0, %v520
  %v522 = vpop.f32.mrb[0].mxu0
  %523 = vmatprep.mubr.bf16.mxu0 %v266
  %524 = vmatmul.mubr.bf16.gmra.mrb[0].mxu0 %v265
  %v525 = vpop.f32.mrb[0].mxu0
  %v526 = vadd.f32 0.0, %v525
  %v527 = vpop.f32.mrb[0].mxu0
  %v528 = vpop.f32.mrb[0].mxu0
  %v529 = vadd.f32 0.0, %v528
  %v530 = vpop.f32.mrb[0].mxu0
  %531 = vmatprep.mubr.bf16.mxu0 %v268
  %532 = vmatmul.mubr.bf16.gmra.mrb[0].mxu0 %v267
  %v533 = vpop.f32.mrb[0].mxu0
  %v534 = vadd.f32 0.0, %v533
  %v535 = vpop.f32.mrb[0].mxu0
  %v536 = vpop.f32.mrb[0].mxu0
  %v537 = vadd.f32 0.0, %v536
  %v538 = vpop.f32.mrb[0].mxu0
  %539 = vmatprep.mubr.bf16.mxu0 %v270
  %540 = vmatmul.mubr.bf16.gmra.mrb[0].mxu0 %v269
  %v541 = vpop.f32.mrb[0].mxu0
  %v542 = vadd.f32 0.0, %v541
  %v543 = vpop.f32.mrb[0].mxu0
  %v544 = vpop.f32.mrb[0].mxu0
  %v545 = vadd.f32 0.0, %v544
  %v546 = vpop.f32.mrb[0].mxu0
  %547 = vmatprep.mubr.bf16.mxu0 %v272
  %548 = vmatmul.mubr.bf16.gmra.mrb[0].mxu0 %v271
  %v549 = vpop.f32.mrb[0].mxu0
  %v550 = vadd.f32 0.0, %v549
  %v551 = vpop.f32.mrb[0].mxu0
  %v552 = vpop.f32.mrb[0].mxu0
  %v553 = vadd.f32 0.0, %v552
  %v554 = vpop.f32.mrb[0].mxu0
  %555 = vmatprep.mubr.bf16.mxu0 %v274
  %556 = vmatmul.mubr.bf16.gmra.mrb[0].mxu0 %v273
  %v557 = vpop.f32.mrb[0].mxu0
  %v558 = vadd.f32 0.0, %v557
  %v559 = vpop.f32.mrb[0].mxu0
  %v560 = vpop.f32.mrb[0].mxu0
  %v561 = vadd.f32 0.0, %v560
  %v562 = vpop.f32.mrb[0].mxu0
  %563 = vdwg.mxu0
  %v564 = vadd.f32 %v51, %v438
  %v565 = vadd.f32 %v52, %v441
  %v566 = vadd.f32 %v53, %v446
  %v567 = vadd.f32 %v54, %v449
  %v568 = vadd.f32 %v55, %v454
  %v569 = vadd.f32 %v56, %v457
  %v570 = vadd.f32 %v57, %v462
  %v571 = vadd.f32 %v58, %v465
  %v572 = vadd.f32 %v59, %v470
  %v573 = vadd.f32 %v60, %v473
  %v574 = vadd.f32 %v61, %v478
  %v575 = vadd.f32 %v62, %v481
  %v576 = vadd.f32 %v63, %v486
  %v577 = vadd.f32 %v64, %v489
  %v578 = vadd.f32 %v65, %v494
  %v579 = vadd.f32 %v66, %v497
  %v580 = vadd.f32 %v67, %v502
  %v581 = vadd.f32 %v68, %v505
  %v582 = vadd.f32 %v69, %v510
  %v583 = vadd.f32 %v70, %v513
  %v584 = vadd.f32 %v71, %v518
  %v585 = vadd.f32 %v72, %v521
  %v586 = vadd.f32 %v73, %v526
  %v587 = vadd.f32 %v74, %v529
  %v588 = vadd.f32 %v75, %v534
  %v589 = vadd.f32 %v76, %v537
  %v590 = vadd.f32 %v77, %v542
  %v591 = vadd.f32 %v78, %v545
  %v592 = vadd.f32 %v79, %v550
  %v593 = vadd.f32 %v80, %v553
  %v594 = vadd.f32 %v81, %v558
  %v595 = vadd.f32 %v82, %v561
  %596 = vst [vmem:[#allocation2] sm:$0xff] %v564
  %597 = vst [vmem:[#allocation2 + $0x8] sm:$0xff] %v565
  %598 = vst [vmem:[#allocation2 + $0x10] sm:$0xff] %v566
  %599 = vst [vmem:[#allocation2 + $0x18] sm:$0xff] %v567
  %600 = vst [vmem:[#allocation2 + $0x20] sm:$0xff] %v568
  %601 = vst [vmem:[#allocation2 + $0x28] sm:$0xff] %v569
  %602 = vst [vmem:[#allocation2 + $0x30] sm:$0xff] %v570
  %603 = vst [vmem:[#allocation2 + $0x38] sm:$0xff] %v571
  %604 = vst [vmem:[#allocation2 + $0x40] sm:$0xff] %v572
  %605 = vst [vmem:[#allocation2 + $0x48] sm:$0xff] %v573
  %606 = vst [vmem:[#allocation2 + $0x50] sm:$0xff] %v574
  %607 = vst [vmem:[#allocation2 + $0x58] sm:$0xff] %v575
  %608 = vst [vmem:[#allocation2 + $0x60] sm:$0xff] %v576
  %609 = vst [vmem:[#allocation2 + $0x68] sm:$0xff] %v577
  %610 = vst [vmem:[#allocation2 + $0x70] sm:$0xff] %v578
  %611 = vst [vmem:[#allocation2 + $0x78] sm:$0xff] %v579
  %612 = vst [vmem:[#allocation2 + $0x80] sm:$0xff] %v580
  %613 = vst [vmem:[#allocation2 + $0x88] sm:$0xff] %v581
  %614 = vst [vmem:[#allocation2 + $0x90] sm:$0xff] %v582
  %615 = vst [vmem:[#allocation2 + $0x98] sm:$0xff] %v583
  %616 = vst [vmem:[#allocation2 + $0xa0] sm:$0xff] %v584
  %617 = vst [vmem:[#allocation2 + $0xa8] sm:$0xff] %v585
  %618 = vst [vmem:[#allocation2 + $0xb0] sm:$0xff] %v586
  %619 = vst [vmem:[#allocation2 + $0xb8] sm:$0xff] %v587
  %620 = vst [vmem:[#allocation2 + $0xc0] sm:$0xff] %v588
  %621 = vst [vmem:[#allocation2 + $0xc8] sm:$0xff] %v589
  %622 = vst [vmem:[#allocation2 + $0xd0] sm:$0xff] %v590
  %623 = vst [vmem:[#allocation2 + $0xd8] sm:$0xff] %v591
  %624 = vst [vmem:[#allocation2 + $0xe0] sm:$0xff] %v592
  %625 = vst [vmem:[#allocation2 + $0xe8] sm:$0xff] %v593
  %626 = vst [vmem:[#allocation2 + $0xf0] sm:$0xff] %v594
  %627 = vst [vmem:[#allocation2 + $0xf8] sm:$0xff] %v595
  // Predicated region
  $region18: #{graphsage_e_forward.2} parent=0 // pred_check
    %p628 = pneg %p15
  $region19: #{graphsage_e_forward.2} parent=0 // pred_check_branch
    %630 = sbr.rel (%p628) target = $region21
  $region20: #{graphsage_e_forward.2} parent=0 // pred_region
    %v631 = vlaneseq
    %v632 = vand.u32 %v631, 127
    %vm633 = vcmp.lt.s32.totalorder %v632, 32
    %v634 = vsel %vm633, 1, 0
    %v635 = vcvt.s32.f32 %v634
    %v636 = vld [vmem:[#allocation2] sm:$0xff]
    %v637 = vld [vmem:[#allocation2 + $0x8] sm:$0xff]
    %v638 = vld [vmem:[#allocation2 + $0x10] sm:$0xff]
    %v639 = vld [vmem:[#allocation2 + $0x18] sm:$0xff]
    %v640 = vld [vmem:[#allocation2 + $0x20] sm:$0xff]
    %v641 = vld [vmem:[#allocation2 + $0x28] sm:$0xff]
    %v642 = vld [vmem:[#allocation2 + $0x30] sm:$0xff]
    %v643 = vld [vmem:[#allocation2 + $0x38] sm:$0xff]
    %v644 = vld [vmem:[#allocation2 + $0x40] sm:$0xff]
    %v645 = vld [vmem:[#allocation2 + $0x48] sm:$0xff]
    %v646 = vld [vmem:[#allocation2 + $0x50] sm:$0xff]
    %v647 = vld [vmem:[#allocation2 + $0x58] sm:$0xff]
    %v648 = vld [vmem:[#allocation2 + $0x60] sm:$0xff]
    %v649 = vld [vmem:[#allocation2 + $0x68] sm:$0xff]
    %v650 = vld [vmem:[#allocation2 + $0x70] sm:$0xff]
    %v651 = vld [vmem:[#allocation2 + $0x78] sm:$0xff]
    %v652 = vld [vmem:[#allocation2 + $0x80] sm:$0xff]
    %v653 = vld [vmem:[#allocation2 + $0x88] sm:$0xff]
    %v654 = vld [vmem:[#allocation2 + $0x90] sm:$0xff]
    %v655 = vld [vmem:[#allocation2 + $0x98] sm:$0xff]
    %v656 = vld [vmem:[#allocation2 + $0xa0] sm:$0xff]
    %v657 = vld [vmem:[#allocation2 + $0xa8] sm:$0xff]
    %v658 = vld [vmem:[#allocation2 + $0xb0] sm:$0xff]
    %v659 = vld [vmem:[#allocation2 + $0xb8] sm:$0xff]
    %v660 = vld [vmem:[#allocation2 + $0xc0] sm:$0xff]
    %v661 = vld [vmem:[#allocation2 + $0xc8] sm:$0xff]
    %v662 = vld [vmem:[#allocation2 + $0xd0] sm:$0xff]
    %v663 = vld [vmem:[#allocation2 + $0xd8] sm:$0xff]
    %v664 = vld [vmem:[#allocation2 + $0xe0] sm:$0xff]
    %v665 = vld [vmem:[#allocation2 + $0xe8] sm:$0xff]
    %v666 = vld [vmem:[#allocation2 + $0xf0] sm:$0xff]
    %v667 = vld [vmem:[#allocation2 + $0xf8] sm:$0xff]
    %v668 = vld [vmem:[%s2] sm:$0xff]
    %v669 = vld [vmem:[%s2 + $0x8] sm:$0xff]
    %v670 = vld [vmem:[%s2 + $0x10] sm:$0xff]
    %v671 = vld [vmem:[%s2 + $0x18] sm:$0xff]
    %v672 = vld [vmem:[%s2 + $0x20] sm:$0xff]
    %v673 = vld [vmem:[%s2 + $0x28] sm:$0xff]
    %v674 = vld [vmem:[%s2 + $0x30] sm:$0xff]
    %v675 = vld [vmem:[%s2 + $0x38] sm:$0xff]
    %v676 = vld [vmem:[%s2 + $0x40] sm:$0xff]
    %v677 = vld [vmem:[%s2 + $0x48] sm:$0xff]
    %v678 = vld [vmem:[%s2 + $0x50] sm:$0xff]
    %v679 = vld [vmem:[%s2 + $0x58] sm:$0xff]
    %v680 = vld [vmem:[%s2 + $0x60] sm:$0xff]
    %v681 = vld [vmem:[%s2 + $0x68] sm:$0xff]
    %v682 = vld [vmem:[%s2 + $0x70] sm:$0xff]
    %v683 = vld [vmem:[%s2 + $0x78] sm:$0xff]
    %v684 = vld [vmem:[%s2 + $0x80] sm:$0xff]
    %v685 = vld [vmem:[%s2 + $0x88] sm:$0xff]
    %v686 = vld [vmem:[%s2 + $0x90] sm:$0xff]
    %v687 = vld [vmem:[%s2 + $0x98] sm:$0xff]
    %v688 = vld [vmem:[%s2 + $0xa0] sm:$0xff]
    %v689 = vld [vmem:[%s2 + $0xa8] sm:$0xff]
    %v690 = vld [vmem:[%s2 + $0xb0] sm:$0xff]
    %v691 = vld [vmem:[%s2 + $0xb8] sm:$0xff]
    %v692 = vld [vmem:[%s2 + $0xc0] sm:$0xff]
    %v693 = vld [vmem:[%s2 + $0xc8] sm:$0xff]
    %v694 = vld [vmem:[%s2 + $0xd0] sm:$0xff]
    %v695 = vld [vmem:[%s2 + $0xd8] sm:$0xff]
    %v696 = vld [vmem:[%s2 + $0xe0] sm:$0xff]
    %v697 = vld [vmem:[%s2 + $0xe8] sm:$0xff]
    %v698 = vld [vmem:[%s2 + $0xf0] sm:$0xff]
    %v699 = vld [vmem:[%s2 + $0xf8] sm:$0xff]
    %701 = vset.pattern.permute.xlu0 0
    %702 = vperm.xlu0 %701, %v668
    %v703 = vpop.permute.xlu0 %702
    %706 = vset.pattern.permute.xlu0 0
    %707 = vperm.xlu0 %706, %v669
    %v708 = vpop.permute.xlu0 %707
    %711 = vset.pattern.permute.xlu0 0
    %712 = vperm.xlu0 %711, %v670
    %v713 = vpop.permute.xlu0 %712
    %716 = vset.pattern.permute.xlu0 0
    %717 = vperm.xlu0 %716, %v671
    %v718 = vpop.permute.xlu0 %717
    %721 = vset.pattern.permute.xlu0 0
    %722 = vperm.xlu0 %721, %v672
    %v723 = vpop.permute.xlu0 %722
    %726 = vset.pattern.permute.xlu0 0
    %727 = vperm.xlu0 %726, %v673
    %v728 = vpop.permute.xlu0 %727
    %731 = vset.pattern.permute.xlu0 0
    %732 = vperm.xlu0 %731, %v674
    %v733 = vpop.permute.xlu0 %732
    %736 = vset.pattern.permute.xlu0 0
    %737 = vperm.xlu0 %736, %v675
    %v738 = vpop.permute.xlu0 %737
    %741 = vset.pattern.permute.xlu0 0
    %742 = vperm.xlu0 %741, %v676
    %v743 = vpop.permute.xlu0 %742
    %746 = vset.pattern.permute.xlu0 0
    %747 = vperm.xlu0 %746, %v677
    %v748 = vpop.permute.xlu0 %747
    %751 = vset.pattern.permute.xlu0 0
    %752 = vperm.xlu0 %751, %v678
    %v753 = vpop.permute.xlu0 %752
    %756 = vset.pattern.permute.xlu0 0
    %757 = vperm.xlu0 %756, %v679
    %v758 = vpop.permute.xlu0 %757
    %761 = vset.pattern.permute.xlu0 0
    %762 = vperm.xlu0 %761, %v680
    %v763 = vpop.permute.xlu0 %762
    %766 = vset.pattern.permute.xlu0 0
    %767 = vperm.xlu0 %766, %v681
    %v768 = vpop.permute.xlu0 %767
    %771 = vset.pattern.permute.xlu0 0
    %772 = vperm.xlu0 %771, %v682
    %v773 = vpop.permute.xlu0 %772
    %776 = vset.pattern.permute.xlu0 0
    %777 = vperm.xlu0 %776, %v683
    %v778 = vpop.permute.xlu0 %777
    %781 = vset.pattern.permute.xlu0 0
    %782 = vperm.xlu0 %781, %v684
    %v783 = vpop.permute.xlu0 %782
    %786 = vset.pattern.permute.xlu0 0
    %787 = vperm.xlu0 %786, %v685
    %v788 = vpop.permute.xlu0 %787
    %791 = vset.pattern.permute.xlu0 0
    %792 = vperm.xlu0 %791, %v686
    %v793 = vpop.permute.xlu0 %792
    %796 = vset.pattern.permute.xlu0 0
    %797 = vperm.xlu0 %796, %v687
    %v798 = vpop.permute.xlu0 %797
    %801 = vset.pattern.permute.xlu0 0
    %802 = vperm.xlu0 %801, %v688
    %v803 = vpop.permute.xlu0 %802
    %806 = vset.pattern.permute.xlu0 0
    %807 = vperm.xlu0 %806, %v689
    %v808 = vpop.permute.xlu0 %807
    %811 = vset.pattern.permute.xlu0 0
    %812 = vperm.xlu0 %811, %v690
    %v813 = vpop.permute.xlu0 %812
    %816 = vset.pattern.permute.xlu0 0
    %817 = vperm.xlu0 %816, %v691
    %v818 = vpop.permute.xlu0 %817
    %821 = vset.pattern.permute.xlu0 0
    %822 = vperm.xlu0 %821, %v692
    %v823 = vpop.permute.xlu0 %822
    %826 = vset.pattern.permute.xlu0 0
    %827 = vperm.xlu0 %826, %v693
    %v828 = vpop.permute.xlu0 %827
    %831 = vset.pattern.permute.xlu0 0
    %832 = vperm.xlu0 %831, %v694
    %v833 = vpop.permute.xlu0 %832
    %836 = vset.pattern.permute.xlu0 0
    %837 = vperm.xlu0 %836, %v695
    %v838 = vpop.permute.xlu0 %837
    %841 = vset.pattern.permute.xlu0 0
    %842 = vperm.xlu0 %841, %v696
    %v843 = vpop.permute.xlu0 %842
    %846 = vset.pattern.permute.xlu0 0
    %847 = vperm.xlu0 %846, %v697
    %v848 = vpop.permute.xlu0 %847
    %851 = vset.pattern.permute.xlu0 0
    %852 = vperm.xlu0 %851, %v698
    %v853 = vpop.permute.xlu0 %852
    %856 = vset.pattern.permute.xlu0 0
    %857 = vperm.xlu0 %856, %v699
    %v858 = vpop.permute.xlu0 %857
    %v860 = vmul.f32 %v703, %v635
    %v861 = vmul.f32 %v708, %v635
    %v862 = vmul.f32 %v713, %v635
    %v863 = vmul.f32 %v718, %v635
    %v864 = vmul.f32 %v723, %v635
    %v865 = vmul.f32 %v728, %v635
    %v866 = vmul.f32 %v733, %v635
    %v867 = vmul.f32 %v738, %v635
    %v868 = vmul.f32 %v743, %v635
    %v869 = vmul.f32 %v748, %v635
    %v870 = vmul.f32 %v753, %v635
    %v871 = vmul.f32 %v758, %v635
    %v872 = vmul.f32 %v763, %v635
    %v873 = vmul.f32 %v768, %v635
    %v874 = vmul.f32 %v773, %v635
    %v875 = vmul.f32 %v778, %v635
    %v876 = vmul.f32 %v783, %v635
    %v877 = vmul.f32 %v788, %v635
    %v878 = vmul.f32 %v793, %v635
    %v879 = vmul.f32 %v798, %v635
    %v880 = vmul.f32 %v803, %v635
    %v881 = vmul.f32 %v808, %v635
    %v882 = vmul.f32 %v813, %v635
    %v883 = vmul.f32 %v818, %v635
    %v884 = vmul.f32 %v823, %v635
    %v885 = vmul.f32 %v828, %v635
    %v886 = vmul.f32 %v833, %v635
    %v887 = vmul.f32 %v838, %v635
    %v888 = vmul.f32 %v843, %v635
    %v889 = vmul.f32 %v848, %v635
    %v890 = vmul.f32 %v853, %v635
    %v891 = vmul.f32 %v858, %v635
    %v892 = vadd.f32 %v636, %v860
    %v893 = vadd.f32 %v637, %v861
    %v894 = vadd.f32 %v638, %v862
    %v895 = vadd.f32 %v639, %v863
    %v896 = vadd.f32 %v640, %v864
    %v897 = vadd.f32 %v641, %v865
    %v898 = vadd.f32 %v642, %v866
    %v899 = vadd.f32 %v643, %v867
    %v900 = vadd.f32 %v644, %v868
    %v901 = vadd.f32 %v645, %v869
    %v902 = vadd.f32 %v646, %v870
    %v903 = vadd.f32 %v647, %v871
    %v904 = vadd.f32 %v648, %v872
    %v905 = vadd.f32 %v649, %v873
    %v906 = vadd.f32 %v650, %v874
    %v907 = vadd.f32 %v651, %v875
    %v908 = vadd.f32 %v652, %v876
    %v909 = vadd.f32 %v653, %v877
    %v910 = vadd.f32 %v654, %v878
    %v911 = vadd.f32 %v655, %v879
    %v912 = vadd.f32 %v656, %v880
    %v913 = vadd.f32 %v657, %v881
    %v914 = vadd.f32 %v658, %v882
    %v915 = vadd.f32 %v659, %v883
    %v916 = vadd.f32 %v660, %v884
    %v917 = vadd.f32 %v661, %v885
    %v918 = vadd.f32 %v662, %v886
    %v919 = vadd.f32 %v663, %v887
    %v920 = vadd.f32 %v664, %v888
    %v921 = vadd.f32 %v665, %v889
    %v922 = vadd.f32 %v666, %v890
    %v923 = vadd.f32 %v667, %v891
    %v924 = vmul.f32 %v892, %v892
    %v925 = vmul.f32 %v893, %v893
    %v926 = vmul.f32 %v894, %v894
    %v927 = vmul.f32 %v895, %v895
    %v928 = vmul.f32 %v896, %v896
    %v929 = vmul.f32 %v897, %v897
    %v930 = vmul.f32 %v898, %v898
    %v931 = vmul.f32 %v899, %v899
    %v932 = vmul.f32 %v900, %v900
    %v933 = vmul.f32 %v901, %v901
    %v934 = vmul.f32 %v902, %v902
    %v935 = vmul.f32 %v903, %v903
    %v936 = vmul.f32 %v904, %v904
    %v937 = vmul.f32 %v905, %v905
    %v938 = vmul.f32 %v906, %v906
    %v939 = vmul.f32 %v907, %v907
    %v940 = vmul.f32 %v908, %v908
    %v941 = vmul.f32 %v909, %v909
    %v942 = vmul.f32 %v910, %v910
    %v943 = vmul.f32 %v911, %v911
    %v944 = vmul.f32 %v912, %v912
    %v945 = vmul.f32 %v913, %v913
    %v946 = vmul.f32 %v914, %v914
    %v947 = vmul.f32 %v915, %v915
    %v948 = vmul.f32 %v916, %v916
    %v949 = vmul.f32 %v917, %v917
    %v950 = vmul.f32 %v918, %v918
    %v951 = vmul.f32 %v919, %v919
    %v952 = vmul.f32 %v920, %v920
    %v953 = vmul.f32 %v921, %v921
    %v954 = vmul.f32 %v922, %v922
    %v955 = vmul.f32 %v923, %v923
    %956 = vadd.xlane.f32.xlu0 %v924
    %v957 = vpop.xlane.xlu0 %956
    %958 = vadd.xlane.f32.xlu0 %v925
    %v959 = vpop.xlane.xlu0 %958
    %960 = vadd.xlane.f32.xlu0 %v926
    %v961 = vpop.xlane.xlu0 %960
    %962 = vadd.xlane.f32.xlu0 %v927
    %v963 = vpop.xlane.xlu0 %962
    %964 = vadd.xlane.f32.xlu0 %v928
    %v965 = vpop.xlane.xlu0 %964
    %966 = vadd.xlane.f32.xlu0 %v929
    %v967 = vpop.xlane.xlu0 %966
    %968 = vadd.xlane.f32.xlu0 %v930
    %v969 = vpop.xlane.xlu0 %968
    %970 = vadd.xlane.f32.xlu0 %v931
    %v971 = vpop.xlane.xlu0 %970
    %972 = vadd.xlane.f32.xlu0 %v932
    %v973 = vpop.xlane.xlu0 %972
    %974 = vadd.xlane.f32.xlu0 %v933
    %v975 = vpop.xlane.xlu0 %974
    %976 = vadd.xlane.f32.xlu0 %v934
    %v977 = vpop.xlane.xlu0 %976
    %978 = vadd.xlane.f32.xlu0 %v935
    %v979 = vpop.xlane.xlu0 %978
    %980 = vadd.xlane.f32.xlu0 %v936
    %v981 = vpop.xlane.xlu0 %980
    %982 = vadd.xlane.f32.xlu0 %v937
    %v983 = vpop.xlane.xlu0 %982
    %984 = vadd.xlane.f32.xlu0 %v938
    %v985 = vpop.xlane.xlu0 %984
    %986 = vadd.xlane.f32.xlu0 %v939
    %v987 = vpop.xlane.xlu0 %986
    %988 = vadd.xlane.f32.xlu0 %v940
    %v989 = vpop.xlane.xlu0 %988
    %990 = vadd.xlane.f32.xlu0 %v941
    %v991 = vpop.xlane.xlu0 %990
    %992 = vadd.xlane.f32.xlu0 %v942
    %v993 = vpop.xlane.xlu0 %992
    %994 = vadd.xlane.f32.xlu0 %v943
    %v995 = vpop.xlane.xlu0 %994
    %996 = vadd.xlane.f32.xlu0 %v944
    %v997 = vpop.xlane.xlu0 %996
    %998 = vadd.xlane.f32.xlu0 %v945
    %v999 = vpop.xlane.xlu0 %998
    %1000 = vadd.xlane.f32.xlu0 %v946
    %v1001 = vpop.xlane.xlu0 %1000
    %1002 = vadd.xlane.f32.xlu0 %v947
    %v1003 = vpop.xlane.xlu0 %1002
    %1004 = vadd.xlane.f32.xlu0 %v948
    %v1005 = vpop.xlane.xlu0 %1004
    %1006 = vadd.xlane.f32.xlu0 %v949
    %v1007 = vpop.xlane.xlu0 %1006
    %1008 = vadd.xlane.f32.xlu0 %v950
    %v1009 = vpop.xlane.xlu0 %1008
    %1010 = vadd.xlane.f32.xlu0 %v951
    %v1011 = vpop.xlane.xlu0 %1010
    %1012 = vadd.xlane.f32.xlu0 %v952
    %v1013 = vpop.xlane.xlu0 %1012
    %1014 = vadd.xlane.f32.xlu0 %v953
    %v1015 = vpop.xlane.xlu0 %1014
    %1016 = vadd.xlane.f32.xlu0 %v954
    %v1017 = vpop.xlane.xlu0 %1016
    %1018 = vadd.xlane.f32.xlu0 %v955
    %v1019 = vpop.xlane.xlu0 %1018
    %v1020 = vmax.f32 %v957, 1e-24
    %v1021 = vmax.f32 %v959, 1e-24
    %v1022 = vmax.f32 %v961, 1e-24
    %v1023 = vmax.f32 %v963, 1e-24
    %v1024 = vmax.f32 %v965, 1e-24
    %v1025 = vmax.f32 %v967, 1e-24
    %v1026 = vmax.f32 %v969, 1e-24
    %v1027 = vmax.f32 %v971, 1e-24
    %v1028 = vmax.f32 %v973, 1e-24
    %v1029 = vmax.f32 %v975, 1e-24
    %v1030 = vmax.f32 %v977, 1e-24
    %v1031 = vmax.f32 %v979, 1e-24
    %v1032 = vmax.f32 %v981, 1e-24
    %v1033 = vmax.f32 %v983, 1e-24
    %v1034 = vmax.f32 %v985, 1e-24
    %v1035 = vmax.f32 %v987, 1e-24
    %v1036 = vmax.f32 %v989, 1e-24
    %v1037 = vmax.f32 %v991, 1e-24
    %v1038 = vmax.f32 %v993, 1e-24
    %v1039 = vmax.f32 %v995, 1e-24
    %v1040 = vmax.f32 %v997, 1e-24
    %v1041 = vmax.f32 %v999, 1e-24
    %v1042 = vmax.f32 %v1001, 1e-24
    %v1043 = vmax.f32 %v1003, 1e-24
    %v1044 = vmax.f32 %v1005, 1e-24
    %v1045 = vmax.f32 %v1007, 1e-24
    %v1046 = vmax.f32 %v1009, 1e-24
    %v1047 = vmax.f32 %v1011, 1e-24
    %v1048 = vmax.f32 %v1013, 1e-24
    %v1049 = vmax.f32 %v1015, 1e-24
    %v1050 = vmax.f32 %v1017, 1e-24
    %v1051 = vmax.f32 %v1019, 1e-24
    %v1052 = vrsqrt.pop %v1020
    %v1053 = vrsqrt.pop %v1021
    %v1054 = vrsqrt.pop %v1022
    %v1055 = vrsqrt.pop %v1023
    %v1056 = vrsqrt.pop %v1024
    %v1057 = vrsqrt.pop %v1025
    %v1058 = vrsqrt.pop %v1026
    %v1059 = vrsqrt.pop %v1027
    %v1060 = vrsqrt.pop %v1028
    %v1061 = vrsqrt.pop %v1029
    %v1062 = vrsqrt.pop %v1030
    %v1063 = vrsqrt.pop %v1031
    %v1064 = vrsqrt.pop %v1032
    %v1065 = vrsqrt.pop %v1033
    %v1066 = vrsqrt.pop %v1034
    %v1067 = vrsqrt.pop %v1035
    %v1068 = vrsqrt.pop %v1036
    %v1069 = vrsqrt.pop %v1037
    %v1070 = vrsqrt.pop %v1038
    %v1071 = vrsqrt.pop %v1039
    %v1072 = vrsqrt.pop %v1040
    %v1073 = vrsqrt.pop %v1041
    %v1074 = vrsqrt.pop %v1042
    %v1075 = vrsqrt.pop %v1043
    %v1076 = vrsqrt.pop %v1044
    %v1077 = vrsqrt.pop %v1045
    %v1078 = vrsqrt.pop %v1046
    %v1079 = vrsqrt.pop %v1047
    %v1080 = vrsqrt.pop %v1048
    %v1081 = vrsqrt.pop %v1049
    %v1082 = vrsqrt.pop %v1050
    %v1083 = vrsqrt.pop %v1051
    %v1084 = vmul.f32 %v1052, 2.0
    %v1085 = vmul.f32 %v1053, 2.0
    %v1086 = vmul.f32 %v1054, 2.0
    %v1087 = vmul.f32 %v1055, 2.0
    %v1088 = vmul.f32 %v1056, 2.0
    %v1089 = vmul.f32 %v1057, 2.0
    %v1090 = vmul.f32 %v1058, 2.0
    %v1091 = vmul.f32 %v1059, 2.0
    %v1092 = vmul.f32 %v1060, 2.0
    %v1093 = vmul.f32 %v1061, 2.0
    %v1094 = vmul.f32 %v1062, 2.0
    %v1095 = vmul.f32 %v1063, 2.0
    %v1096 = vmul.f32 %v1064, 2.0
    %v1097 = vmul.f32 %v1065, 2.0
    %v1098 = vmul.f32 %v1066, 2.0
    %v1099 = vmul.f32 %v1067, 2.0
    %v1100 = vmul.f32 %v1068, 2.0
    %v1101 = vmul.f32 %v1069, 2.0
    %v1102 = vmul.f32 %v1070, 2.0
    %v1103 = vmul.f32 %v1071, 2.0
    %v1104 = vmul.f32 %v1072, 2.0
    %v1105 = vmul.f32 %v1073, 2.0
    %v1106 = vmul.f32 %v1074, 2.0
    %v1107 = vmul.f32 %v1075, 2.0
    %v1108 = vmul.f32 %v1076, 2.0
    %v1109 = vmul.f32 %v1077, 2.0
    %v1110 = vmul.f32 %v1078, 2.0
    %v1111 = vmul.f32 %v1079, 2.0
    %v1112 = vmul.f32 %v1080, 2.0
    %v1113 = vmul.f32 %v1081, 2.0
    %v1114 = vmul.f32 %v1082, 2.0
    %v1115 = vmul.f32 %v1083, 2.0
    %v1116 = vmul.f32 %v892, %v1084
    %v1117 = vmul.f32 %v893, %v1085
    %v1118 = vmul.f32 %v894, %v1086
    %v1119 = vmul.f32 %v895, %v1087
    %v1120 = vmul.f32 %v896, %v1088
    %v1121 = vmul.f32 %v897, %v1089
    %v1122 = vmul.f32 %v898, %v1090
    %v1123 = vmul.f32 %v899, %v1091
    %v1124 = vmul.f32 %v900, %v1092
    %v1125 = vmul.f32 %v901, %v1093
    %v1126 = vmul.f32 %v902, %v1094
    %v1127 = vmul.f32 %v903, %v1095
    %v1128 = vmul.f32 %v904, %v1096
    %v1129 = vmul.f32 %v905, %v1097
    %v1130 = vmul.f32 %v906, %v1098
    %v1131 = vmul.f32 %v907, %v1099
    %v1132 = vmul.f32 %v908, %v1100
    %v1133 = vmul.f32 %v909, %v1101
    %v1134 = vmul.f32 %v910, %v1102
    %v1135 = vmul.f32 %v911, %v1103
    %v1136 = vmul.f32 %v912, %v1104
    %v1137 = vmul.f32 %v913, %v1105
    %v1138 = vmul.f32 %v914, %v1106
    %v1139 = vmul.f32 %v915, %v1107
    %v1140 = vmul.f32 %v916, %v1108
    %v1141 = vmul.f32 %v917, %v1109
    %v1142 = vmul.f32 %v918, %v1110
    %v1143 = vmul.f32 %v919, %v1111
    %v1144 = vmul.f32 %v920, %v1112
    %v1145 = vmul.f32 %v921, %v1113
    %v1146 = vmul.f32 %v922, %v1114
    %v1147 = vmul.f32 %v923, %v1115
    %v1148 = vmax.f32 %v1116, 0.0
    %v1149 = vmax.f32 %v1117, 0.0
    %v1150 = vmax.f32 %v1118, 0.0
    %v1151 = vmax.f32 %v1119, 0.0
    %v1152 = vmax.f32 %v1120, 0.0
    %v1153 = vmax.f32 %v1121, 0.0
    %v1154 = vmax.f32 %v1122, 0.0
    %v1155 = vmax.f32 %v1123, 0.0
    %v1156 = vmax.f32 %v1124, 0.0
    %v1157 = vmax.f32 %v1125, 0.0
    %v1158 = vmax.f32 %v1126, 0.0
    %v1159 = vmax.f32 %v1127, 0.0
    %v1160 = vmax.f32 %v1128, 0.0
    %v1161 = vmax.f32 %v1129, 0.0
    %v1162 = vmax.f32 %v1130, 0.0
    %v1163 = vmax.f32 %v1131, 0.0
    %v1164 = vmax.f32 %v1132, 0.0
    %v1165 = vmax.f32 %v1133, 0.0
    %v1166 = vmax.f32 %v1134, 0.0
    %v1167 = vmax.f32 %v1135, 0.0
    %v1168 = vmax.f32 %v1136, 0.0
    %v1169 = vmax.f32 %v1137, 0.0
    %v1170 = vmax.f32 %v1138, 0.0
    %v1171 = vmax.f32 %v1139, 0.0
    %v1172 = vmax.f32 %v1140, 0.0
    %v1173 = vmax.f32 %v1141, 0.0
    %v1174 = vmax.f32 %v1142, 0.0
    %v1175 = vmax.f32 %v1143, 0.0
    %v1176 = vmax.f32 %v1144, 0.0
    %v1177 = vmax.f32 %v1145, 0.0
    %v1178 = vmax.f32 %v1146, 0.0
    %v1179 = vmax.f32 %v1147, 0.0
    %v1180 = vpack.c.bf16 %v1149, %v1148
    %v1181 = vpack.c.bf16 %v1151, %v1150
    %v1182 = vpack.c.bf16 %v1153, %v1152
    %v1183 = vpack.c.bf16 %v1155, %v1154
    %v1184 = vpack.c.bf16 %v1157, %v1156
    %v1185 = vpack.c.bf16 %v1159, %v1158
    %v1186 = vpack.c.bf16 %v1161, %v1160
    %v1187 = vpack.c.bf16 %v1163, %v1162
    %v1188 = vpack.c.bf16 %v1165, %v1164
    %v1189 = vpack.c.bf16 %v1167, %v1166
    %v1190 = vpack.c.bf16 %v1169, %v1168
    %v1191 = vpack.c.bf16 %v1171, %v1170
    %v1192 = vpack.c.bf16 %v1173, %v1172
    %v1193 = vpack.c.bf16 %v1175, %v1174
    %v1194 = vpack.c.bf16 %v1177, %v1176
    %v1195 = vpack.c.bf16 %v1179, %v1178
    %v1212 = vunpack.c.l.b16 %v1180
    %v1213 = vunpack.c.h.b16 %v1180
    %v1214 = vunpack.c.l.b16 %v1181
    %v1215 = vunpack.c.h.b16 %v1181
    %v1216 = vunpack.c.l.b16 %v1182
    %v1217 = vunpack.c.h.b16 %v1182
    %v1218 = vunpack.c.l.b16 %v1183
    %v1219 = vunpack.c.h.b16 %v1183
    %v1220 = vunpack.c.l.b16 %v1184
    %v1221 = vunpack.c.h.b16 %v1184
    %v1222 = vunpack.c.l.b16 %v1185
    %v1223 = vunpack.c.h.b16 %v1185
    %v1224 = vunpack.c.l.b16 %v1186
    %v1225 = vunpack.c.h.b16 %v1186
    %v1226 = vunpack.c.l.b16 %v1187
    %v1227 = vunpack.c.h.b16 %v1187
    %v1228 = vunpack.c.l.b16 %v1188
    %v1229 = vunpack.c.h.b16 %v1188
    %v1230 = vunpack.c.l.b16 %v1189
    %v1231 = vunpack.c.h.b16 %v1189
    %v1232 = vunpack.c.l.b16 %v1190
    %v1233 = vunpack.c.h.b16 %v1190
    %v1234 = vunpack.c.l.b16 %v1191
    %v1235 = vunpack.c.h.b16 %v1191
    %v1236 = vunpack.c.l.b16 %v1192
    %v1237 = vunpack.c.h.b16 %v1192
    %v1238 = vunpack.c.l.b16 %v1193
    %v1239 = vunpack.c.h.b16 %v1193
    %v1240 = vunpack.c.l.b16 %v1194
    %v1241 = vunpack.c.h.b16 %v1194
    %v1242 = vunpack.c.l.b16 %v1195
    %v1243 = vunpack.c.h.b16 %v1195
    %v1244 = vpack.c.b16 %v1212, %v1212
    %v1245 = vpack.c.b16 %v1213, %v1213
    %v1246 = vpack.c.b16 %v1214, %v1214
    %v1247 = vpack.c.b16 %v1215, %v1215
    %v1248 = vpack.c.b16 %v1216, %v1216
    %v1249 = vpack.c.b16 %v1217, %v1217
    %v1250 = vpack.c.b16 %v1218, %v1218
    %v1251 = vpack.c.b16 %v1219, %v1219
    %v1252 = vpack.c.b16 %v1220, %v1220
    %v1253 = vpack.c.b16 %v1221, %v1221
    %v1254 = vpack.c.b16 %v1222, %v1222
    %v1255 = vpack.c.b16 %v1223, %v1223
    %v1256 = vpack.c.b16 %v1224, %v1224
    %v1257 = vpack.c.b16 %v1225, %v1225
    %v1258 = vpack.c.b16 %v1226, %v1226
    %v1259 = vpack.c.b16 %v1227, %v1227
    %v1260 = vpack.c.b16 %v1228, %v1228
    %v1261 = vpack.c.b16 %v1229, %v1229
    %v1262 = vpack.c.b16 %v1230, %v1230
    %v1263 = vpack.c.b16 %v1231, %v1231
    %v1264 = vpack.c.b16 %v1232, %v1232
    %v1265 = vpack.c.b16 %v1233, %v1233
    %v1266 = vpack.c.b16 %v1234, %v1234
    %v1267 = vpack.c.b16 %v1235, %v1235
    %v1268 = vpack.c.b16 %v1236, %v1236
    %v1269 = vpack.c.b16 %v1237, %v1237
    %v1270 = vpack.c.b16 %v1238, %v1238
    %v1271 = vpack.c.b16 %v1239, %v1239
    %v1272 = vpack.c.b16 %v1240, %v1240
    %v1273 = vpack.c.b16 %v1241, %v1241
    %v1274 = vpack.c.b16 %v1242, %v1242
    %v1275 = vpack.c.b16 %v1243, %v1243
    %1308 = vst [vmem:[%s3] sm:$0xf] %v1244
    %1309 = vst [vmem:[%s3 + $0x4] sm:$0xf] %v1245
    %1310 = vst [vmem:[%s3 + $0x8] sm:$0xf] %v1246
    %1311 = vst [vmem:[%s3 + $0xc] sm:$0xf] %v1247
    %1312 = vst [vmem:[%s3 + $0x10] sm:$0xf] %v1248
    %1313 = vst [vmem:[%s3 + $0x14] sm:$0xf] %v1249
    %1314 = vst [vmem:[%s3 + $0x18] sm:$0xf] %v1250
    %1315 = vst [vmem:[%s3 + $0x1c] sm:$0xf] %v1251
    %1316 = vst [vmem:[%s3 + $0x20] sm:$0xf] %v1252
    %1317 = vst [vmem:[%s3 + $0x24] sm:$0xf] %v1253
    %1318 = vst [vmem:[%s3 + $0x28] sm:$0xf] %v1254
    %1319 = vst [vmem:[%s3 + $0x2c] sm:$0xf] %v1255
    %1320 = vst [vmem:[%s3 + $0x30] sm:$0xf] %v1256
    %1321 = vst [vmem:[%s3 + $0x34] sm:$0xf] %v1257
    %1322 = vst [vmem:[%s3 + $0x38] sm:$0xf] %v1258
    %1323 = vst [vmem:[%s3 + $0x3c] sm:$0xf] %v1259
    %1324 = vst [vmem:[%s3 + $0x40] sm:$0xf] %v1260
    %1325 = vst [vmem:[%s3 + $0x44] sm:$0xf] %v1261
    %1326 = vst [vmem:[%s3 + $0x48] sm:$0xf] %v1262
    %1327 = vst [vmem:[%s3 + $0x4c] sm:$0xf] %v1263
    %1328 = vst [vmem:[%s3 + $0x50] sm:$0xf] %v1264
    %1329 = vst [vmem:[%s3 + $0x54] sm:$0xf] %v1265
    %1330 = vst [vmem:[%s3 + $0x58] sm:$0xf] %v1266
    %1331 = vst [vmem:[%s3 + $0x5c] sm:$0xf] %v1267
    %1332 = vst [vmem:[%s3 + $0x60] sm:$0xf] %v1268
    %1333 = vst [vmem:[%s3 + $0x64] sm:$0xf] %v1269
    %1334 = vst [vmem:[%s3 + $0x68] sm:$0xf] %v1270
    %1335 = vst [vmem:[%s3 + $0x6c] sm:$0xf] %v1271
    %1336 = vst [vmem:[%s3 + $0x70] sm:$0xf] %v1272
    %1337 = vst [vmem:[%s3 + $0x74] sm:$0xf] %v1273
    %1338 = vst [vmem:[%s3 + $0x78] sm:$0xf] %v1274
    %1339 = vst [vmem:[%s3 + $0x7c] sm:$0xf] %v1275
  $region21: #{graphsage_e_forward.2} parent=0 // pred_fallthru
    _
  // Predicated region
  $region22: #{graphsage_e_forward.2} parent=0 // pred_check
    _
  $region23: #{graphsage_e_forward.2} parent=0 // pred_check_branch
    %1341 = sbr.rel (0) target = $region25
  $region24: #{graphsage_e_forward.2} parent=0 // pred_region
    _
  $region25: #{graphsage_e_forward.2} parent=0 // pred_fallthru
    _
  // Predicated region
  $region26: #{graphsage_e_forward.2} parent=0 // pred_check
    _
  $region27: #{graphsage_e_forward.2} parent=0 // pred_check_branch
    %1343 = sbr.rel (0) target = $region29
  $region28: #{graphsage_e_forward.2} parent=0 // pred_region
    _
  $region29: #{graphsage_e_forward.2} parent=0 // pred_fallthru
    _

// kernel: graphsage_e_forward.3
$region0: #{graphsage_e_forward.3}
  #allocation0 [shape = 'u32[]', space=smem, size = 0x4, offset = 0x4, fixed_abs, tag = 'smem constant byte address 0x4 - core index']
  #allocation1 [shape = 'u32[144,128]{1,0:T(1,128)}', space=vmem, size = 0x12000, scoped, tag = 'internal scratch']
  #allocation2 [shape = 'f32[256,128]{1,0:T(8,128)}', space=vmem, size = 0x20000, scoped, tag = 'scratch operand']
  %s0 = inlined_call_operand.vmem [shape: bf16[256,256], index: 0, kind: input, shape index: {}]
  %s1 = inlined_call_operand.vmem [shape: bf16[256,128], index: 1, kind: input, shape index: {}]
  %s2 = inlined_call_operand.vmem [shape: f32[256,1], index: 2, kind: input, shape index: {}]
  %s3 = inlined_call_operand.vmem [shape: f32[256,128], index: 3, kind: output, shape index: {}]
  %s4 = sld [smem:[#allocation0]]
  $region30: #{graphsage_e_forward.3} parent=0
    _
  %s6 = ssub.s32 1, %s4
  %s7 = scalar_select 0, %s6, %s4
  // Predicated region
  $region2: #{graphsage_e_forward.3} parent=0 // pred_check
    _
  $region3: #{graphsage_e_forward.3} parent=0 // pred_check_branch
    %9 = sbr.rel (0) target = $region5
  $region4: #{graphsage_e_forward.3} parent=0 // pred_region
    _
  $region5: #{graphsage_e_forward.3} parent=0 // pred_fallthru
    _
  // Predicated region
  $region6: #{graphsage_e_forward.3} parent=0 // pred_check
    _
  $region7: #{graphsage_e_forward.3} parent=0 // pred_check_branch
    %11 = sbr.rel (0) target = $region9
  $region8: #{graphsage_e_forward.3} parent=0 // pred_region
    _
  $region9: #{graphsage_e_forward.3} parent=0 // pred_fallthru
    _
  // Predicated region
  $region10: #{graphsage_e_forward.3} parent=0 // pred_check
    _
  $region11: #{graphsage_e_forward.3} parent=0 // pred_check_branch
    %13 = sbr.rel (0) target = $region13
  $region12: #{graphsage_e_forward.3} parent=0 // pred_region
    _
  $region13: #{graphsage_e_forward.3} parent=0 // pred_fallthru
    _
  %p15 = scmp.eq.s32.totalorder 0, 0
  // Predicated region
  $region14: #{graphsage_e_forward.3} parent=0 // pred_check
    %p16 = pneg %p15
  $region15: #{graphsage_e_forward.3} parent=0 // pred_check_branch
    %18 = sbr.rel (%p16) target = $region17
  $region16: #{graphsage_e_forward.3} parent=0 // pred_region
    %19 = vst [vmem:[#allocation2] sm:$0xff] 0.0
    %20 = vst [vmem:[#allocation2 + $0x8] sm:$0xff] 0.0
    %21 = vst [vmem:[#allocation2 + $0x10] sm:$0xff] 0.0
    %22 = vst [vmem:[#allocation2 + $0x18] sm:$0xff] 0.0
    %23 = vst [vmem:[#allocation2 + $0x20] sm:$0xff] 0.0
    %24 = vst [vmem:[#allocation2 + $0x28] sm:$0xff] 0.0
    %25 = vst [vmem:[#allocation2 + $0x30] sm:$0xff] 0.0
    %26 = vst [vmem:[#allocation2 + $0x38] sm:$0xff] 0.0
    %27 = vst [vmem:[#allocation2 + $0x40] sm:$0xff] 0.0
    %28 = vst [vmem:[#allocation2 + $0x48] sm:$0xff] 0.0
    %29 = vst [vmem:[#allocation2 + $0x50] sm:$0xff] 0.0
    %30 = vst [vmem:[#allocation2 + $0x58] sm:$0xff] 0.0
    %31 = vst [vmem:[#allocation2 + $0x60] sm:$0xff] 0.0
    %32 = vst [vmem:[#allocation2 + $0x68] sm:$0xff] 0.0
    %33 = vst [vmem:[#allocation2 + $0x70] sm:$0xff] 0.0
    %34 = vst [vmem:[#allocation2 + $0x78] sm:$0xff] 0.0
    %35 = vst [vmem:[#allocation2 + $0x80] sm:$0xff] 0.0
    %36 = vst [vmem:[#allocation2 + $0x88] sm:$0xff] 0.0
    %37 = vst [vmem:[#allocation2 + $0x90] sm:$0xff] 0.0
    %38 = vst [vmem:[#allocation2 + $0x98] sm:$0xff] 0.0
    %39 = vst [vmem:[#allocation2 + $0xa0] sm:$0xff] 0.0
    %40 = vst [vmem:[#allocation2 + $0xa8] sm:$0xff] 0.0
    %41 = vst [vmem:[#allocation2 + $0xb0] sm:$0xff] 0.0
    %42 = vst [vmem:[#allocation2 + $0xb8] sm:$0xff] 0.0
    %43 = vst [vmem:[#allocation2 + $0xc0] sm:$0xff] 0.0
    %44 = vst [vmem:[#allocation2 + $0xc8] sm:$0xff] 0.0
    %45 = vst [vmem:[#allocation2 + $0xd0] sm:$0xff] 0.0
    %46 = vst [vmem:[#allocation2 + $0xd8] sm:$0xff] 0.0
    %47 = vst [vmem:[#allocation2 + $0xe0] sm:$0xff] 0.0
    %48 = vst [vmem:[#allocation2 + $0xe8] sm:$0xff] 0.0
    %49 = vst [vmem:[#allocation2 + $0xf0] sm:$0xff] 0.0
    %50 = vst [vmem:[#allocation2 + $0xf8] sm:$0xff] 0.0
  $region17: #{graphsage_e_forward.3} parent=0 // pred_fallthru
    _
  %v51 = vld [vmem:[#allocation2] sm:$0xff]
  %v52 = vld [vmem:[#allocation2 + $0x8] sm:$0xff]
  %v53 = vld [vmem:[#allocation2 + $0x10] sm:$0xff]
  %v54 = vld [vmem:[#allocation2 + $0x18] sm:$0xff]
  %v55 = vld [vmem:[#allocation2 + $0x20] sm:$0xff]
  %v56 = vld [vmem:[#allocation2 + $0x28] sm:$0xff]
  %v57 = vld [vmem:[#allocation2 + $0x30] sm:$0xff]
  %v58 = vld [vmem:[#allocation2 + $0x38] sm:$0xff]
  %v59 = vld [vmem:[#allocation2 + $0x40] sm:$0xff]
  %v60 = vld [vmem:[#allocation2 + $0x48] sm:$0xff]
  %v61 = vld [vmem:[#allocation2 + $0x50] sm:$0xff]
  %v62 = vld [vmem:[#allocation2 + $0x58] sm:$0xff]
  %v63 = vld [vmem:[#allocation2 + $0x60] sm:$0xff]
  %v64 = vld [vmem:[#allocation2 + $0x68] sm:$0xff]
  %v65 = vld [vmem:[#allocation2 + $0x70] sm:$0xff]
  %v66 = vld [vmem:[#allocation2 + $0x78] sm:$0xff]
  %v67 = vld [vmem:[#allocation2 + $0x80] sm:$0xff]
  %v68 = vld [vmem:[#allocation2 + $0x88] sm:$0xff]
  %v69 = vld [vmem:[#allocation2 + $0x90] sm:$0xff]
  %v70 = vld [vmem:[#allocation2 + $0x98] sm:$0xff]
  %v71 = vld [vmem:[#allocation2 + $0xa0] sm:$0xff]
  %v72 = vld [vmem:[#allocation2 + $0xa8] sm:$0xff]
  %v73 = vld [vmem:[#allocation2 + $0xb0] sm:$0xff]
  %v74 = vld [vmem:[#allocation2 + $0xb8] sm:$0xff]
  %v75 = vld [vmem:[#allocation2 + $0xc0] sm:$0xff]
  %v76 = vld [vmem:[#allocation2 + $0xc8] sm:$0xff]
  %v77 = vld [vmem:[#allocation2 + $0xd0] sm:$0xff]
  %v78 = vld [vmem:[#allocation2 + $0xd8] sm:$0xff]
  %v79 = vld [vmem:[#allocation2 + $0xe0] sm:$0xff]
  %v80 = vld [vmem:[#allocation2 + $0xe8] sm:$0xff]
  %v81 = vld [vmem:[#allocation2 + $0xf0] sm:$0xff]
  %v82 = vld [vmem:[#allocation2 + $0xf8] sm:$0xff]
  %v83 = vld [vmem:[%s0] sm:$0xff]
  %v84 = vld [vmem:[%s0 + $0x8] sm:$0xff]
  %v85 = vld [vmem:[%s0 + $0x10] sm:$0xff]
  %v86 = vld [vmem:[%s0 + $0x18] sm:$0xff]
  %v87 = vld [vmem:[%s0 + $0x20] sm:$0xff]
  %v88 = vld [vmem:[%s0 + $0x28] sm:$0xff]
  %v89 = vld [vmem:[%s0 + $0x30] sm:$0xff]
  %v90 = vld [vmem:[%s0 + $0x38] sm:$0xff]
  %v91 = vld [vmem:[%s0 + $0x40] sm:$0xff]
  %v92 = vld [vmem:[%s0 + $0x48] sm:$0xff]
  %v93 = vld [vmem:[%s0 + $0x50] sm:$0xff]
  %v94 = vld [vmem:[%s0 + $0x58] sm:$0xff]
  %v95 = vld [vmem:[%s0 + $0x60] sm:$0xff]
  %v96 = vld [vmem:[%s0 + $0x68] sm:$0xff]
  %v97 = vld [vmem:[%s0 + $0x70] sm:$0xff]
  %v98 = vld [vmem:[%s0 + $0x78] sm:$0xff]
  %v99 = vld [vmem:[%s0 + $0x80] sm:$0xff]
  %v100 = vld [vmem:[%s0 + $0x88] sm:$0xff]
  %v101 = vld [vmem:[%s0 + $0x90] sm:$0xff]
  %v102 = vld [vmem:[%s0 + $0x98] sm:$0xff]
  %v103 = vld [vmem:[%s0 + $0xa0] sm:$0xff]
  %v104 = vld [vmem:[%s0 + $0xa8] sm:$0xff]
  %v105 = vld [vmem:[%s0 + $0xb0] sm:$0xff]
  %v106 = vld [vmem:[%s0 + $0xb8] sm:$0xff]
  %v107 = vld [vmem:[%s0 + $0xc0] sm:$0xff]
  %v108 = vld [vmem:[%s0 + $0xc8] sm:$0xff]
  %v109 = vld [vmem:[%s0 + $0xd0] sm:$0xff]
  %v110 = vld [vmem:[%s0 + $0xd8] sm:$0xff]
  %v111 = vld [vmem:[%s0 + $0xe0] sm:$0xff]
  %v112 = vld [vmem:[%s0 + $0xe8] sm:$0xff]
  %v113 = vld [vmem:[%s0 + $0xf0] sm:$0xff]
  %v114 = vld [vmem:[%s0 + $0xf8] sm:$0xff]
  %v115 = vld [vmem:[%s1] sm:$0xf]
  %v116 = vld [vmem:[%s1 + $0x4] sm:$0xf]
  %v117 = vld [vmem:[%s1 + $0x8] sm:$0xf]
  %v118 = vld [vmem:[%s1 + $0xc] sm:$0xf]
  %v119 = vld [vmem:[%s1 + $0x10] sm:$0xf]
  %v120 = vld [vmem:[%s1 + $0x14] sm:$0xf]
  %v121 = vld [vmem:[%s1 + $0x18] sm:$0xf]
  %v122 = vld [vmem:[%s1 + $0x1c] sm:$0xf]
  %v123 = vld [vmem:[%s1 + $0x20] sm:$0xf]
  %v124 = vld [vmem:[%s1 + $0x24] sm:$0xf]
  %v125 = vld [vmem:[%s1 + $0x28] sm:$0xf]
  %v126 = vld [vmem:[%s1 + $0x2c] sm:$0xf]
  %v127 = vld [vmem:[%s1 + $0x30] sm:$0xf]
  %v128 = vld [vmem:[%s1 + $0x34] sm:$0xf]
  %v129 = vld [vmem:[%s1 + $0x38] sm:$0xf]
  %v130 = vld [vmem:[%s1 + $0x3c] sm:$0xf]
  %v131 = vld [vmem:[%s1 + $0x40] sm:$0xf]
  %v132 = vld [vmem:[%s1 + $0x44] sm:$0xf]
  %v133 = vld [vmem:[%s1 + $0x48] sm:$0xf]
  %v134 = vld [vmem:[%s1 + $0x4c] sm:$0xf]
  %v135 = vld [vmem:[%s1 + $0x50] sm:$0xf]
  %v136 = vld [vmem:[%s1 + $0x54] sm:$0xf]
  %v137 = vld [vmem:[%s1 + $0x58] sm:$0xf]
  %v138 = vld [vmem:[%s1 + $0x5c] sm:$0xf]
  %v139 = vld [vmem:[%s1 + $0x60] sm:$0xf]
  %v140 = vld [vmem:[%s1 + $0x64] sm:$0xf]
  %v141 = vld [vmem:[%s1 + $0x68] sm:$0xf]
  %v142 = vld [vmem:[%s1 + $0x6c] sm:$0xf]
  %v143 = vld [vmem:[%s1 + $0x70] sm:$0xf]
  %v144 = vld [vmem:[%s1 + $0x74] sm:$0xf]
  %v145 = vld [vmem:[%s1 + $0x78] sm:$0xf]
  %v146 = vld [vmem:[%s1 + $0x7c] sm:$0xf]
  %v179 = vunpack.c.l.b16 %v83
  %v180 = vunpack.c.h.b16 %v83
  %v181 = vunpack.c.l.b16 %v84
  %v182 = vunpack.c.h.b16 %v84
  %v183 = vunpack.c.l.b16 %v85
  %v184 = vunpack.c.h.b16 %v85
  %v185 = vunpack.c.l.b16 %v86
  %v186 = vunpack.c.h.b16 %v86
  %v187 = vunpack.c.l.b16 %v87
  %v188 = vunpack.c.h.b16 %v87
  %v189 = vunpack.c.l.b16 %v88
  %v190 = vunpack.c.h.b16 %v88
  %v191 = vunpack.c.l.b16 %v89
  %v192 = vunpack.c.h.b16 %v89
  %v193 = vunpack.c.l.b16 %v90
  %v194 = vunpack.c.h.b16 %v90
  %v195 = vunpack.c.l.b16 %v91
  %v196 = vunpack.c.h.b16 %v91
  %v197 = vunpack.c.l.b16 %v92
  %v198 = vunpack.c.h.b16 %v92
  %v199 = vunpack.c.l.b16 %v93
  %v200 = vunpack.c.h.b16 %v93
  %v201 = vunpack.c.l.b16 %v94
  %v202 = vunpack.c.h.b16 %v94
  %v203 = vunpack.c.l.b16 %v95
  %v204 = vunpack.c.h.b16 %v95
  %v205 = vunpack.c.l.b16 %v96
  %v206 = vunpack.c.h.b16 %v96
  %v207 = vunpack.c.l.b16 %v97
  %v208 = vunpack.c.h.b16 %v97
  %v209 = vunpack.c.l.b16 %v98
  %v210 = vunpack.c.h.b16 %v98
  %v211 = vunpack.c.l.b16 %v99
  %v212 = vunpack.c.h.b16 %v99
  %v213 = vunpack.c.l.b16 %v100
  %v214 = vunpack.c.h.b16 %v100
  %v215 = vunpack.c.l.b16 %v101
  %v216 = vunpack.c.h.b16 %v101
  %v217 = vunpack.c.l.b16 %v102
  %v218 = vunpack.c.h.b16 %v102
  %v219 = vunpack.c.l.b16 %v103
  %v220 = vunpack.c.h.b16 %v103
  %v221 = vunpack.c.l.b16 %v104
  %v222 = vunpack.c.h.b16 %v104
  %v223 = vunpack.c.l.b16 %v105
  %v224 = vunpack.c.h.b16 %v105
  %v225 = vunpack.c.l.b16 %v106
  %v226 = vunpack.c.h.b16 %v106
  %v227 = vunpack.c.l.b16 %v107
  %v228 = vunpack.c.h.b16 %v107
  %v229 = vunpack.c.l.b16 %v108
  %v230 = vunpack.c.h.b16 %v108
  %v231 = vunpack.c.l.b16 %v109
  %v232 = vunpack.c.h.b16 %v109
  %v233 = vunpack.c.l.b16 %v110
  %v234 = vunpack.c.h.b16 %v110
  %v235 = vunpack.c.l.b16 %v111
  %v236 = vunpack.c.h.b16 %v111
  %v237 = vunpack.c.l.b16 %v112
  %v238 = vunpack.c.h.b16 %v112
  %v239 = vunpack.c.l.b16 %v113
  %v240 = vunpack.c.h.b16 %v113
  %v241 = vunpack.c.l.b16 %v114
  %v242 = vunpack.c.h.b16 %v114
  %v243 = vpack.c.b16 %v181, %v179
  %v244 = vpack.c.b16 %v182, %v180
  %v245 = vpack.c.b16 %v185, %v183
  %v246 = vpack.c.b16 %v186, %v184
  %v247 = vpack.c.b16 %v189, %v187
  %v248 = vpack.c.b16 %v190, %v188
  %v249 = vpack.c.b16 %v193, %v191
  %v250 = vpack.c.b16 %v194, %v192
  %v251 = vpack.c.b16 %v197, %v195
  %v252 = vpack.c.b16 %v198, %v196
  %v253 = vpack.c.b16 %v201, %v199
  %v254 = vpack.c.b16 %v202, %v200
  %v255 = vpack.c.b16 %v205, %v203
  %v256 = vpack.c.b16 %v206, %v204
  %v257 = vpack.c.b16 %v209, %v207
  %v258 = vpack.c.b16 %v210, %v208
  %v259 = vpack.c.b16 %v213, %v211
  %v260 = vpack.c.b16 %v214, %v212
  %v261 = vpack.c.b16 %v217, %v215
  %v262 = vpack.c.b16 %v218, %v216
  %v263 = vpack.c.b16 %v221, %v219
  %v264 = vpack.c.b16 %v222, %v220
  %v265 = vpack.c.b16 %v225, %v223
  %v266 = vpack.c.b16 %v226, %v224
  %v267 = vpack.c.b16 %v229, %v227
  %v268 = vpack.c.b16 %v230, %v228
  %v269 = vpack.c.b16 %v233, %v231
  %v270 = vpack.c.b16 %v234, %v232
  %v271 = vpack.c.b16 %v237, %v235
  %v272 = vpack.c.b16 %v238, %v236
  %v273 = vpack.c.b16 %v241, %v239
  %v274 = vpack.c.b16 %v242, %v240
  %v339 = vunpack.c.l.b16 %v115
  %v340 = vunpack.c.l.b16 %v116
  %v341 = vunpack.c.l.b16 %v117
  %v342 = vunpack.c.l.b16 %v118
  %v343 = vunpack.c.l.b16 %v119
  %v344 = vunpack.c.l.b16 %v120
  %v345 = vunpack.c.l.b16 %v121
  %v346 = vunpack.c.l.b16 %v122
  %v347 = vunpack.c.l.b16 %v123
  %v348 = vunpack.c.l.b16 %v124
  %v349 = vunpack.c.l.b16 %v125
  %v350 = vunpack.c.l.b16 %v126
  %v351 = vunpack.c.l.b16 %v127
  %v352 = vunpack.c.l.b16 %v128
  %v353 = vunpack.c.l.b16 %v129
  %v354 = vunpack.c.l.b16 %v130
  %v355 = vunpack.c.l.b16 %v131
  %v356 = vunpack.c.l.b16 %v132
  %v357 = vunpack.c.l.b16 %v133
  %v358 = vunpack.c.l.b16 %v134
  %v359 = vunpack.c.l.b16 %v135
  %v360 = vunpack.c.l.b16 %v136
  %v361 = vunpack.c.l.b16 %v137
  %v362 = vunpack.c.l.b16 %v138
  %v363 = vunpack.c.l.b16 %v139
  %v364 = vunpack.c.l.b16 %v140
  %v365 = vunpack.c.l.b16 %v141
  %v366 = vunpack.c.l.b16 %v142
  %v367 = vunpack.c.l.b16 %v143
  %v368 = vunpack.c.l.b16 %v144
  %v369 = vunpack.c.l.b16 %v145
  %v370 = vunpack.c.l.b16 %v146
  %v371 = vpack.c.b16 %v340, %v339
  %v372 = vpack.c.b16 %v342, %v341
  %v373 = vpack.c.b16 %v344, %v343
  %v374 = vpack.c.b16 %v346, %v345
  %v375 = vpack.c.b16 %v348, %v347
  %v376 = vpack.c.b16 %v350, %v349
  %v377 = vpack.c.b16 %v352, %v351
  %v378 = vpack.c.b16 %v354, %v353
  %v379 = vpack.c.b16 %v356, %v355
  %v380 = vpack.c.b16 %v358, %v357
  %v381 = vpack.c.b16 %v360, %v359
  %v382 = vpack.c.b16 %v362, %v361
  %v383 = vpack.c.b16 %v364, %v363
  %v384 = vpack.c.b16 %v366, %v365
  %v385 = vpack.c.b16 %v368, %v367
  %v386 = vpack.c.b16 %v370, %v369
  %403 = vmatprep.subr.bf16.mxu0 0
  %404 = vmatpush1.bf16.msra.mxu0 %v371
  %405 = vmatprep.subr.bf16.mxu0 0
  %406 = vmatpush1.bf16.msra.mxu0 %v372
  %407 = vmatprep.subr.bf16.mxu0 0
  %408 = vmatpush1.bf16.msra.mxu0 %v373
  %409 = vmatprep.subr.bf16.mxu0 0
  %410 = vmatpush1.bf16.msra.mxu0 %v374
  %411 = vmatprep.subr.bf16.mxu0 0
  %412 = vmatpush1.bf16.msra.mxu0 %v375
  %413 = vmatprep.subr.bf16.mxu0 0
  %414 = vmatpush1.bf16.msra.mxu0 %v376
  %415 = vmatprep.subr.bf16.mxu0 0
  %416 = vmatpush1.bf16.msra.mxu0 %v377
  %417 = vmatprep.subr.bf16.mxu0 0
  %418 = vmatpush1.bf16.msra.mxu0 %v378
  %419 = vmatprep.subr.bf16.mxu0 0
  %420 = vmatpush1.bf16.msra.mxu0 %v379
  %421 = vmatprep.subr.bf16.mxu0 0
  %422 = vmatpush1.bf16.msra.mxu0 %v380
  %423 = vmatprep.subr.bf16.mxu0 0
  %424 = vmatpush1.bf16.msra.mxu0 %v381
  %425 = vmatprep.subr.bf16.mxu0 0
  %426 = vmatpush1.bf16.msra.mxu0 %v382
  %427 = vmatprep.subr.bf16.mxu0 0
  %428 = vmatpush1.bf16.msra.mxu0 %v383
  %429 = vmatprep.subr.bf16.mxu0 0
  %430 = vmatpush1.bf16.msra.mxu0 %v384
  %431 = vmatprep.subr.bf16.mxu0 0
  %432 = vmatpush1.bf16.msra.mxu0 %v385
  %433 = vmatprep.subr.bf16.mxu0 0
  %434 = vmatpush1.bf16.msra.mxu0 %v386
  %435 = vmatprep.mubr.bf16.mxu0 %v244
  %436 = vmatmul.mubr.bf16.gmra.mrb[0].mxu0 %v243
  %v437 = vpop.f32.mrb[0].mxu0
  %v438 = vadd.f32 0.0, %v437
  %v439 = vpop.f32.mrb[0].mxu0
  %v440 = vpop.f32.mrb[0].mxu0
  %v441 = vadd.f32 0.0, %v440
  %v442 = vpop.f32.mrb[0].mxu0
  %443 = vmatprep.mubr.bf16.mxu0 %v246
  %444 = vmatmul.mubr.bf16.gmra.mrb[0].mxu0 %v245
  %v445 = vpop.f32.mrb[0].mxu0
  %v446 = vadd.f32 0.0, %v445
  %v447 = vpop.f32.mrb[0].mxu0
  %v448 = vpop.f32.mrb[0].mxu0
  %v449 = vadd.f32 0.0, %v448
  %v450 = vpop.f32.mrb[0].mxu0
  %451 = vmatprep.mubr.bf16.mxu0 %v248
  %452 = vmatmul.mubr.bf16.gmra.mrb[0].mxu0 %v247
  %v453 = vpop.f32.mrb[0].mxu0
  %v454 = vadd.f32 0.0, %v453
  %v455 = vpop.f32.mrb[0].mxu0
  %v456 = vpop.f32.mrb[0].mxu0
  %v457 = vadd.f32 0.0, %v456
  %v458 = vpop.f32.mrb[0].mxu0
  %459 = vmatprep.mubr.bf16.mxu0 %v250
  %460 = vmatmul.mubr.bf16.gmra.mrb[0].mxu0 %v249
  %v461 = vpop.f32.mrb[0].mxu0
  %v462 = vadd.f32 0.0, %v461
  %v463 = vpop.f32.mrb[0].mxu0
  %v464 = vpop.f32.mrb[0].mxu0
  %v465 = vadd.f32 0.0, %v464
  %v466 = vpop.f32.mrb[0].mxu0
  %467 = vmatprep.mubr.bf16.mxu0 %v252
  %468 = vmatmul.mubr.bf16.gmra.mrb[0].mxu0 %v251
  %v469 = vpop.f32.mrb[0].mxu0
  %v470 = vadd.f32 0.0, %v469
  %v471 = vpop.f32.mrb[0].mxu0
  %v472 = vpop.f32.mrb[0].mxu0
  %v473 = vadd.f32 0.0, %v472
  %v474 = vpop.f32.mrb[0].mxu0
  %475 = vmatprep.mubr.bf16.mxu0 %v254
  %476 = vmatmul.mubr.bf16.gmra.mrb[0].mxu0 %v253
  %v477 = vpop.f32.mrb[0].mxu0
  %v478 = vadd.f32 0.0, %v477
  %v479 = vpop.f32.mrb[0].mxu0
  %v480 = vpop.f32.mrb[0].mxu0
  %v481 = vadd.f32 0.0, %v480
  %v482 = vpop.f32.mrb[0].mxu0
  %483 = vmatprep.mubr.bf16.mxu0 %v256
  %484 = vmatmul.mubr.bf16.gmra.mrb[0].mxu0 %v255
  %v485 = vpop.f32.mrb[0].mxu0
  %v486 = vadd.f32 0.0, %v485
  %v487 = vpop.f32.mrb[0].mxu0
  %v488 = vpop.f32.mrb[0].mxu0
  %v489 = vadd.f32 0.0, %v488
  %v490 = vpop.f32.mrb[0].mxu0
  %491 = vmatprep.mubr.bf16.mxu0 %v258
  %492 = vmatmul.mubr.bf16.gmra.mrb[0].mxu0 %v257
  %v493 = vpop.f32.mrb[0].mxu0
  %v494 = vadd.f32 0.0, %v493
  %v495 = vpop.f32.mrb[0].mxu0
  %v496 = vpop.f32.mrb[0].mxu0
  %v497 = vadd.f32 0.0, %v496
  %v498 = vpop.f32.mrb[0].mxu0
  %499 = vmatprep.mubr.bf16.mxu0 %v260
  %500 = vmatmul.mubr.bf16.gmra.mrb[0].mxu0 %v259
  %v501 = vpop.f32.mrb[0].mxu0
  %v502 = vadd.f32 0.0, %v501
  %v503 = vpop.f32.mrb[0].mxu0
  %v504 = vpop.f32.mrb[0].mxu0
  %v505 = vadd.f32 0.0, %v504
  %v506 = vpop.f32.mrb[0].mxu0
  %507 = vmatprep.mubr.bf16.mxu0 %v262
  %508 = vmatmul.mubr.bf16.gmra.mrb[0].mxu0 %v261
  %v509 = vpop.f32.mrb[0].mxu0
  %v510 = vadd.f32 0.0, %v509
  %v511 = vpop.f32.mrb[0].mxu0
  %v512 = vpop.f32.mrb[0].mxu0
  %v513 = vadd.f32 0.0, %v512
  %v514 = vpop.f32.mrb[0].mxu0
  %515 = vmatprep.mubr.bf16.mxu0 %v264
  %516 = vmatmul.mubr.bf16.gmra.mrb[0].mxu0 %v263
  %v517 = vpop.f32.mrb[0].mxu0
  %v518 = vadd.f32 0.0, %v517
  %v519 = vpop.f32.mrb[0].mxu0
  %v520 = vpop.f32.mrb[0].mxu0
  %v521 = vadd.f32 0.0, %v520
  %v522 = vpop.f32.mrb[0].mxu0
  %523 = vmatprep.mubr.bf16.mxu0 %v266
  %524 = vmatmul.mubr.bf16.gmra.mrb[0].mxu0 %v265
  %v525 = vpop.f32.mrb[0].mxu0
  %v526 = vadd.f32 0.0, %v525
  %v527 = vpop.f32.mrb[0].mxu0
  %v528 = vpop.f32.mrb[0].mxu0
  %v529 = vadd.f32 0.0, %v528
  %v530 = vpop.f32.mrb[0].mxu0
  %531 = vmatprep.mubr.bf16.mxu0 %v268
  %532 = vmatmul.mubr.bf16.gmra.mrb[0].mxu0 %v267
  %v533 = vpop.f32.mrb[0].mxu0
  %v534 = vadd.f32 0.0, %v533
  %v535 = vpop.f32.mrb[0].mxu0
  %v536 = vpop.f32.mrb[0].mxu0
  %v537 = vadd.f32 0.0, %v536
  %v538 = vpop.f32.mrb[0].mxu0
  %539 = vmatprep.mubr.bf16.mxu0 %v270
  %540 = vmatmul.mubr.bf16.gmra.mrb[0].mxu0 %v269
  %v541 = vpop.f32.mrb[0].mxu0
  %v542 = vadd.f32 0.0, %v541
  %v543 = vpop.f32.mrb[0].mxu0
  %v544 = vpop.f32.mrb[0].mxu0
  %v545 = vadd.f32 0.0, %v544
  %v546 = vpop.f32.mrb[0].mxu0
  %547 = vmatprep.mubr.bf16.mxu0 %v272
  %548 = vmatmul.mubr.bf16.gmra.mrb[0].mxu0 %v271
  %v549 = vpop.f32.mrb[0].mxu0
  %v550 = vadd.f32 0.0, %v549
  %v551 = vpop.f32.mrb[0].mxu0
  %v552 = vpop.f32.mrb[0].mxu0
  %v553 = vadd.f32 0.0, %v552
  %v554 = vpop.f32.mrb[0].mxu0
  %555 = vmatprep.mubr.bf16.mxu0 %v274
  %556 = vmatmul.mubr.bf16.gmra.mrb[0].mxu0 %v273
  %v557 = vpop.f32.mrb[0].mxu0
  %v558 = vadd.f32 0.0, %v557
  %v559 = vpop.f32.mrb[0].mxu0
  %v560 = vpop.f32.mrb[0].mxu0
  %v561 = vadd.f32 0.0, %v560
  %v562 = vpop.f32.mrb[0].mxu0
  %563 = vdwg.mxu0
  %v564 = vadd.f32 %v51, %v438
  %v565 = vadd.f32 %v52, %v441
  %v566 = vadd.f32 %v53, %v446
  %v567 = vadd.f32 %v54, %v449
  %v568 = vadd.f32 %v55, %v454
  %v569 = vadd.f32 %v56, %v457
  %v570 = vadd.f32 %v57, %v462
  %v571 = vadd.f32 %v58, %v465
  %v572 = vadd.f32 %v59, %v470
  %v573 = vadd.f32 %v60, %v473
  %v574 = vadd.f32 %v61, %v478
  %v575 = vadd.f32 %v62, %v481
  %v576 = vadd.f32 %v63, %v486
  %v577 = vadd.f32 %v64, %v489
  %v578 = vadd.f32 %v65, %v494
  %v579 = vadd.f32 %v66, %v497
  %v580 = vadd.f32 %v67, %v502
  %v581 = vadd.f32 %v68, %v505
  %v582 = vadd.f32 %v69, %v510
  %v583 = vadd.f32 %v70, %v513
  %v584 = vadd.f32 %v71, %v518
  %v585 = vadd.f32 %v72, %v521
  %v586 = vadd.f32 %v73, %v526
  %v587 = vadd.f32 %v74, %v529
  %v588 = vadd.f32 %v75, %v534
  %v589 = vadd.f32 %v76, %v537
  %v590 = vadd.f32 %v77, %v542
  %v591 = vadd.f32 %v78, %v545
  %v592 = vadd.f32 %v79, %v550
  %v593 = vadd.f32 %v80, %v553
  %v594 = vadd.f32 %v81, %v558
  %v595 = vadd.f32 %v82, %v561
  %596 = vst [vmem:[#allocation2] sm:$0xff] %v564
  %597 = vst [vmem:[#allocation2 + $0x8] sm:$0xff] %v565
  %598 = vst [vmem:[#allocation2 + $0x10] sm:$0xff] %v566
  %599 = vst [vmem:[#allocation2 + $0x18] sm:$0xff] %v567
  %600 = vst [vmem:[#allocation2 + $0x20] sm:$0xff] %v568
  %601 = vst [vmem:[#allocation2 + $0x28] sm:$0xff] %v569
  %602 = vst [vmem:[#allocation2 + $0x30] sm:$0xff] %v570
  %603 = vst [vmem:[#allocation2 + $0x38] sm:$0xff] %v571
  %604 = vst [vmem:[#allocation2 + $0x40] sm:$0xff] %v572
  %605 = vst [vmem:[#allocation2 + $0x48] sm:$0xff] %v573
  %606 = vst [vmem:[#allocation2 + $0x50] sm:$0xff] %v574
  %607 = vst [vmem:[#allocation2 + $0x58] sm:$0xff] %v575
  %608 = vst [vmem:[#allocation2 + $0x60] sm:$0xff] %v576
  %609 = vst [vmem:[#allocation2 + $0x68] sm:$0xff] %v577
  %610 = vst [vmem:[#allocation2 + $0x70] sm:$0xff] %v578
  %611 = vst [vmem:[#allocation2 + $0x78] sm:$0xff] %v579
  %612 = vst [vmem:[#allocation2 + $0x80] sm:$0xff] %v580
  %613 = vst [vmem:[#allocation2 + $0x88] sm:$0xff] %v581
  %614 = vst [vmem:[#allocation2 + $0x90] sm:$0xff] %v582
  %615 = vst [vmem:[#allocation2 + $0x98] sm:$0xff] %v583
  %616 = vst [vmem:[#allocation2 + $0xa0] sm:$0xff] %v584
  %617 = vst [vmem:[#allocation2 + $0xa8] sm:$0xff] %v585
  %618 = vst [vmem:[#allocation2 + $0xb0] sm:$0xff] %v586
  %619 = vst [vmem:[#allocation2 + $0xb8] sm:$0xff] %v587
  %620 = vst [vmem:[#allocation2 + $0xc0] sm:$0xff] %v588
  %621 = vst [vmem:[#allocation2 + $0xc8] sm:$0xff] %v589
  %622 = vst [vmem:[#allocation2 + $0xd0] sm:$0xff] %v590
  %623 = vst [vmem:[#allocation2 + $0xd8] sm:$0xff] %v591
  %624 = vst [vmem:[#allocation2 + $0xe0] sm:$0xff] %v592
  %625 = vst [vmem:[#allocation2 + $0xe8] sm:$0xff] %v593
  %626 = vst [vmem:[#allocation2 + $0xf0] sm:$0xff] %v594
  %627 = vst [vmem:[#allocation2 + $0xf8] sm:$0xff] %v595
  // Predicated region
  $region18: #{graphsage_e_forward.3} parent=0 // pred_check
    %p628 = pneg %p15
  $region19: #{graphsage_e_forward.3} parent=0 // pred_check_branch
    %630 = sbr.rel (%p628) target = $region21
  $region20: #{graphsage_e_forward.3} parent=0 // pred_region
    %v631 = vlaneseq
    %v632 = vand.u32 %v631, 127
    %vm633 = vcmp.lt.s32.totalorder %v632, 32
    %v634 = vsel %vm633, 1, 0
    %v635 = vcvt.s32.f32 %v634
    %v636 = vld [vmem:[#allocation2] sm:$0xff]
    %v637 = vld [vmem:[#allocation2 + $0x8] sm:$0xff]
    %v638 = vld [vmem:[#allocation2 + $0x10] sm:$0xff]
    %v639 = vld [vmem:[#allocation2 + $0x18] sm:$0xff]
    %v640 = vld [vmem:[#allocation2 + $0x20] sm:$0xff]
    %v641 = vld [vmem:[#allocation2 + $0x28] sm:$0xff]
    %v642 = vld [vmem:[#allocation2 + $0x30] sm:$0xff]
    %v643 = vld [vmem:[#allocation2 + $0x38] sm:$0xff]
    %v644 = vld [vmem:[#allocation2 + $0x40] sm:$0xff]
    %v645 = vld [vmem:[#allocation2 + $0x48] sm:$0xff]
    %v646 = vld [vmem:[#allocation2 + $0x50] sm:$0xff]
    %v647 = vld [vmem:[#allocation2 + $0x58] sm:$0xff]
    %v648 = vld [vmem:[#allocation2 + $0x60] sm:$0xff]
    %v649 = vld [vmem:[#allocation2 + $0x68] sm:$0xff]
    %v650 = vld [vmem:[#allocation2 + $0x70] sm:$0xff]
    %v651 = vld [vmem:[#allocation2 + $0x78] sm:$0xff]
    %v652 = vld [vmem:[#allocation2 + $0x80] sm:$0xff]
    %v653 = vld [vmem:[#allocation2 + $0x88] sm:$0xff]
    %v654 = vld [vmem:[#allocation2 + $0x90] sm:$0xff]
    %v655 = vld [vmem:[#allocation2 + $0x98] sm:$0xff]
    %v656 = vld [vmem:[#allocation2 + $0xa0] sm:$0xff]
    %v657 = vld [vmem:[#allocation2 + $0xa8] sm:$0xff]
    %v658 = vld [vmem:[#allocation2 + $0xb0] sm:$0xff]
    %v659 = vld [vmem:[#allocation2 + $0xb8] sm:$0xff]
    %v660 = vld [vmem:[#allocation2 + $0xc0] sm:$0xff]
    %v661 = vld [vmem:[#allocation2 + $0xc8] sm:$0xff]
    %v662 = vld [vmem:[#allocation2 + $0xd0] sm:$0xff]
    %v663 = vld [vmem:[#allocation2 + $0xd8] sm:$0xff]
    %v664 = vld [vmem:[#allocation2 + $0xe0] sm:$0xff]
    %v665 = vld [vmem:[#allocation2 + $0xe8] sm:$0xff]
    %v666 = vld [vmem:[#allocation2 + $0xf0] sm:$0xff]
    %v667 = vld [vmem:[#allocation2 + $0xf8] sm:$0xff]
    %v668 = vld [vmem:[%s2] sm:$0xff]
    %v669 = vld [vmem:[%s2 + $0x8] sm:$0xff]
    %v670 = vld [vmem:[%s2 + $0x10] sm:$0xff]
    %v671 = vld [vmem:[%s2 + $0x18] sm:$0xff]
    %v672 = vld [vmem:[%s2 + $0x20] sm:$0xff]
    %v673 = vld [vmem:[%s2 + $0x28] sm:$0xff]
    %v674 = vld [vmem:[%s2 + $0x30] sm:$0xff]
    %v675 = vld [vmem:[%s2 + $0x38] sm:$0xff]
    %v676 = vld [vmem:[%s2 + $0x40] sm:$0xff]
    %v677 = vld [vmem:[%s2 + $0x48] sm:$0xff]
    %v678 = vld [vmem:[%s2 + $0x50] sm:$0xff]
    %v679 = vld [vmem:[%s2 + $0x58] sm:$0xff]
    %v680 = vld [vmem:[%s2 + $0x60] sm:$0xff]
    %v681 = vld [vmem:[%s2 + $0x68] sm:$0xff]
    %v682 = vld [vmem:[%s2 + $0x70] sm:$0xff]
    %v683 = vld [vmem:[%s2 + $0x78] sm:$0xff]
    %v684 = vld [vmem:[%s2 + $0x80] sm:$0xff]
    %v685 = vld [vmem:[%s2 + $0x88] sm:$0xff]
    %v686 = vld [vmem:[%s2 + $0x90] sm:$0xff]
    %v687 = vld [vmem:[%s2 + $0x98] sm:$0xff]
    %v688 = vld [vmem:[%s2 + $0xa0] sm:$0xff]
    %v689 = vld [vmem:[%s2 + $0xa8] sm:$0xff]
    %v690 = vld [vmem:[%s2 + $0xb0] sm:$0xff]
    %v691 = vld [vmem:[%s2 + $0xb8] sm:$0xff]
    %v692 = vld [vmem:[%s2 + $0xc0] sm:$0xff]
    %v693 = vld [vmem:[%s2 + $0xc8] sm:$0xff]
    %v694 = vld [vmem:[%s2 + $0xd0] sm:$0xff]
    %v695 = vld [vmem:[%s2 + $0xd8] sm:$0xff]
    %v696 = vld [vmem:[%s2 + $0xe0] sm:$0xff]
    %v697 = vld [vmem:[%s2 + $0xe8] sm:$0xff]
    %v698 = vld [vmem:[%s2 + $0xf0] sm:$0xff]
    %v699 = vld [vmem:[%s2 + $0xf8] sm:$0xff]
    %701 = vset.pattern.permute.xlu0 0
    %702 = vperm.xlu0 %701, %v668
    %v703 = vpop.permute.xlu0 %702
    %706 = vset.pattern.permute.xlu0 0
    %707 = vperm.xlu0 %706, %v669
    %v708 = vpop.permute.xlu0 %707
    %711 = vset.pattern.permute.xlu0 0
    %712 = vperm.xlu0 %711, %v670
    %v713 = vpop.permute.xlu0 %712
    %716 = vset.pattern.permute.xlu0 0
    %717 = vperm.xlu0 %716, %v671
    %v718 = vpop.permute.xlu0 %717
    %721 = vset.pattern.permute.xlu0 0
    %722 = vperm.xlu0 %721, %v672
    %v723 = vpop.permute.xlu0 %722
    %726 = vset.pattern.permute.xlu0 0
    %727 = vperm.xlu0 %726, %v673
    %v728 = vpop.permute.xlu0 %727
    %731 = vset.pattern.permute.xlu0 0
    %732 = vperm.xlu0 %731, %v674
    %v733 = vpop.permute.xlu0 %732
    %736 = vset.pattern.permute.xlu0 0
    %737 = vperm.xlu0 %736, %v675
    %v738 = vpop.permute.xlu0 %737
    %741 = vset.pattern.permute.xlu0 0
    %742 = vperm.xlu0 %741, %v676
    %v743 = vpop.permute.xlu0 %742
    %746 = vset.pattern.permute.xlu0 0
    %747 = vperm.xlu0 %746, %v677
    %v748 = vpop.permute.xlu0 %747
    %751 = vset.pattern.permute.xlu0 0
    %752 = vperm.xlu0 %751, %v678
    %v753 = vpop.permute.xlu0 %752
    %756 = vset.pattern.permute.xlu0 0
    %757 = vperm.xlu0 %756, %v679
    %v758 = vpop.permute.xlu0 %757
    %761 = vset.pattern.permute.xlu0 0
    %762 = vperm.xlu0 %761, %v680
    %v763 = vpop.permute.xlu0 %762
    %766 = vset.pattern.permute.xlu0 0
    %767 = vperm.xlu0 %766, %v681
    %v768 = vpop.permute.xlu0 %767
    %771 = vset.pattern.permute.xlu0 0
    %772 = vperm.xlu0 %771, %v682
    %v773 = vpop.permute.xlu0 %772
    %776 = vset.pattern.permute.xlu0 0
    %777 = vperm.xlu0 %776, %v683
    %v778 = vpop.permute.xlu0 %777
    %781 = vset.pattern.permute.xlu0 0
    %782 = vperm.xlu0 %781, %v684
    %v783 = vpop.permute.xlu0 %782
    %786 = vset.pattern.permute.xlu0 0
    %787 = vperm.xlu0 %786, %v685
    %v788 = vpop.permute.xlu0 %787
    %791 = vset.pattern.permute.xlu0 0
    %792 = vperm.xlu0 %791, %v686
    %v793 = vpop.permute.xlu0 %792
    %796 = vset.pattern.permute.xlu0 0
    %797 = vperm.xlu0 %796, %v687
    %v798 = vpop.permute.xlu0 %797
    %801 = vset.pattern.permute.xlu0 0
    %802 = vperm.xlu0 %801, %v688
    %v803 = vpop.permute.xlu0 %802
    %806 = vset.pattern.permute.xlu0 0
    %807 = vperm.xlu0 %806, %v689
    %v808 = vpop.permute.xlu0 %807
    %811 = vset.pattern.permute.xlu0 0
    %812 = vperm.xlu0 %811, %v690
    %v813 = vpop.permute.xlu0 %812
    %816 = vset.pattern.permute.xlu0 0
    %817 = vperm.xlu0 %816, %v691
    %v818 = vpop.permute.xlu0 %817
    %821 = vset.pattern.permute.xlu0 0
    %822 = vperm.xlu0 %821, %v692
    %v823 = vpop.permute.xlu0 %822
    %826 = vset.pattern.permute.xlu0 0
    %827 = vperm.xlu0 %826, %v693
    %v828 = vpop.permute.xlu0 %827
    %831 = vset.pattern.permute.xlu0 0
    %832 = vperm.xlu0 %831, %v694
    %v833 = vpop.permute.xlu0 %832
    %836 = vset.pattern.permute.xlu0 0
    %837 = vperm.xlu0 %836, %v695
    %v838 = vpop.permute.xlu0 %837
    %841 = vset.pattern.permute.xlu0 0
    %842 = vperm.xlu0 %841, %v696
    %v843 = vpop.permute.xlu0 %842
    %846 = vset.pattern.permute.xlu0 0
    %847 = vperm.xlu0 %846, %v697
    %v848 = vpop.permute.xlu0 %847
    %851 = vset.pattern.permute.xlu0 0
    %852 = vperm.xlu0 %851, %v698
    %v853 = vpop.permute.xlu0 %852
    %856 = vset.pattern.permute.xlu0 0
    %857 = vperm.xlu0 %856, %v699
    %v858 = vpop.permute.xlu0 %857
    %v860 = vmul.f32 %v703, %v635
    %v861 = vmul.f32 %v708, %v635
    %v862 = vmul.f32 %v713, %v635
    %v863 = vmul.f32 %v718, %v635
    %v864 = vmul.f32 %v723, %v635
    %v865 = vmul.f32 %v728, %v635
    %v866 = vmul.f32 %v733, %v635
    %v867 = vmul.f32 %v738, %v635
    %v868 = vmul.f32 %v743, %v635
    %v869 = vmul.f32 %v748, %v635
    %v870 = vmul.f32 %v753, %v635
    %v871 = vmul.f32 %v758, %v635
    %v872 = vmul.f32 %v763, %v635
    %v873 = vmul.f32 %v768, %v635
    %v874 = vmul.f32 %v773, %v635
    %v875 = vmul.f32 %v778, %v635
    %v876 = vmul.f32 %v783, %v635
    %v877 = vmul.f32 %v788, %v635
    %v878 = vmul.f32 %v793, %v635
    %v879 = vmul.f32 %v798, %v635
    %v880 = vmul.f32 %v803, %v635
    %v881 = vmul.f32 %v808, %v635
    %v882 = vmul.f32 %v813, %v635
    %v883 = vmul.f32 %v818, %v635
    %v884 = vmul.f32 %v823, %v635
    %v885 = vmul.f32 %v828, %v635
    %v886 = vmul.f32 %v833, %v635
    %v887 = vmul.f32 %v838, %v635
    %v888 = vmul.f32 %v843, %v635
    %v889 = vmul.f32 %v848, %v635
    %v890 = vmul.f32 %v853, %v635
    %v891 = vmul.f32 %v858, %v635
    %v892 = vadd.f32 %v636, %v860
    %v893 = vadd.f32 %v637, %v861
    %v894 = vadd.f32 %v638, %v862
    %v895 = vadd.f32 %v639, %v863
    %v896 = vadd.f32 %v640, %v864
    %v897 = vadd.f32 %v641, %v865
    %v898 = vadd.f32 %v642, %v866
    %v899 = vadd.f32 %v643, %v867
    %v900 = vadd.f32 %v644, %v868
    %v901 = vadd.f32 %v645, %v869
    %v902 = vadd.f32 %v646, %v870
    %v903 = vadd.f32 %v647, %v871
    %v904 = vadd.f32 %v648, %v872
    %v905 = vadd.f32 %v649, %v873
    %v906 = vadd.f32 %v650, %v874
    %v907 = vadd.f32 %v651, %v875
    %v908 = vadd.f32 %v652, %v876
    %v909 = vadd.f32 %v653, %v877
    %v910 = vadd.f32 %v654, %v878
    %v911 = vadd.f32 %v655, %v879
    %v912 = vadd.f32 %v656, %v880
    %v913 = vadd.f32 %v657, %v881
    %v914 = vadd.f32 %v658, %v882
    %v915 = vadd.f32 %v659, %v883
    %v916 = vadd.f32 %v660, %v884
    %v917 = vadd.f32 %v661, %v885
    %v918 = vadd.f32 %v662, %v886
    %v919 = vadd.f32 %v663, %v887
    %v920 = vadd.f32 %v664, %v888
    %v921 = vadd.f32 %v665, %v889
    %v922 = vadd.f32 %v666, %v890
    %v923 = vadd.f32 %v667, %v891
    %v924 = vmul.f32 %v892, %v892
    %v925 = vmul.f32 %v893, %v893
    %v926 = vmul.f32 %v894, %v894
    %v927 = vmul.f32 %v895, %v895
    %v928 = vmul.f32 %v896, %v896
    %v929 = vmul.f32 %v897, %v897
    %v930 = vmul.f32 %v898, %v898
    %v931 = vmul.f32 %v899, %v899
    %v932 = vmul.f32 %v900, %v900
    %v933 = vmul.f32 %v901, %v901
    %v934 = vmul.f32 %v902, %v902
    %v935 = vmul.f32 %v903, %v903
    %v936 = vmul.f32 %v904, %v904
    %v937 = vmul.f32 %v905, %v905
    %v938 = vmul.f32 %v906, %v906
    %v939 = vmul.f32 %v907, %v907
    %v940 = vmul.f32 %v908, %v908
    %v941 = vmul.f32 %v909, %v909
    %v942 = vmul.f32 %v910, %v910
    %v943 = vmul.f32 %v911, %v911
    %v944 = vmul.f32 %v912, %v912
    %v945 = vmul.f32 %v913, %v913
    %v946 = vmul.f32 %v914, %v914
    %v947 = vmul.f32 %v915, %v915
    %v948 = vmul.f32 %v916, %v916
    %v949 = vmul.f32 %v917, %v917
    %v950 = vmul.f32 %v918, %v918
    %v951 = vmul.f32 %v919, %v919
    %v952 = vmul.f32 %v920, %v920
    %v953 = vmul.f32 %v921, %v921
    %v954 = vmul.f32 %v922, %v922
    %v955 = vmul.f32 %v923, %v923
    %956 = vadd.xlane.f32.xlu0 %v924
    %v957 = vpop.xlane.xlu0 %956
    %958 = vadd.xlane.f32.xlu0 %v925
    %v959 = vpop.xlane.xlu0 %958
    %960 = vadd.xlane.f32.xlu0 %v926
    %v961 = vpop.xlane.xlu0 %960
    %962 = vadd.xlane.f32.xlu0 %v927
    %v963 = vpop.xlane.xlu0 %962
    %964 = vadd.xlane.f32.xlu0 %v928
    %v965 = vpop.xlane.xlu0 %964
    %966 = vadd.xlane.f32.xlu0 %v929
    %v967 = vpop.xlane.xlu0 %966
    %968 = vadd.xlane.f32.xlu0 %v930
    %v969 = vpop.xlane.xlu0 %968
    %970 = vadd.xlane.f32.xlu0 %v931
    %v971 = vpop.xlane.xlu0 %970
    %972 = vadd.xlane.f32.xlu0 %v932
    %v973 = vpop.xlane.xlu0 %972
    %974 = vadd.xlane.f32.xlu0 %v933
    %v975 = vpop.xlane.xlu0 %974
    %976 = vadd.xlane.f32.xlu0 %v934
    %v977 = vpop.xlane.xlu0 %976
    %978 = vadd.xlane.f32.xlu0 %v935
    %v979 = vpop.xlane.xlu0 %978
    %980 = vadd.xlane.f32.xlu0 %v936
    %v981 = vpop.xlane.xlu0 %980
    %982 = vadd.xlane.f32.xlu0 %v937
    %v983 = vpop.xlane.xlu0 %982
    %984 = vadd.xlane.f32.xlu0 %v938
    %v985 = vpop.xlane.xlu0 %984
    %986 = vadd.xlane.f32.xlu0 %v939
    %v987 = vpop.xlane.xlu0 %986
    %988 = vadd.xlane.f32.xlu0 %v940
    %v989 = vpop.xlane.xlu0 %988
    %990 = vadd.xlane.f32.xlu0 %v941
    %v991 = vpop.xlane.xlu0 %990
    %992 = vadd.xlane.f32.xlu0 %v942
    %v993 = vpop.xlane.xlu0 %992
    %994 = vadd.xlane.f32.xlu0 %v943
    %v995 = vpop.xlane.xlu0 %994
    %996 = vadd.xlane.f32.xlu0 %v944
    %v997 = vpop.xlane.xlu0 %996
    %998 = vadd.xlane.f32.xlu0 %v945
    %v999 = vpop.xlane.xlu0 %998
    %1000 = vadd.xlane.f32.xlu0 %v946
    %v1001 = vpop.xlane.xlu0 %1000
    %1002 = vadd.xlane.f32.xlu0 %v947
    %v1003 = vpop.xlane.xlu0 %1002
    %1004 = vadd.xlane.f32.xlu0 %v948
    %v1005 = vpop.xlane.xlu0 %1004
    %1006 = vadd.xlane.f32.xlu0 %v949
    %v1007 = vpop.xlane.xlu0 %1006
    %1008 = vadd.xlane.f32.xlu0 %v950
    %v1009 = vpop.xlane.xlu0 %1008
    %1010 = vadd.xlane.f32.xlu0 %v951
    %v1011 = vpop.xlane.xlu0 %1010
    %1012 = vadd.xlane.f32.xlu0 %v952
    %v1013 = vpop.xlane.xlu0 %1012
    %1014 = vadd.xlane.f32.xlu0 %v953
    %v1015 = vpop.xlane.xlu0 %1014
    %1016 = vadd.xlane.f32.xlu0 %v954
    %v1017 = vpop.xlane.xlu0 %1016
    %1018 = vadd.xlane.f32.xlu0 %v955
    %v1019 = vpop.xlane.xlu0 %1018
    %v1020 = vmax.f32 %v957, 1e-24
    %v1021 = vmax.f32 %v959, 1e-24
    %v1022 = vmax.f32 %v961, 1e-24
    %v1023 = vmax.f32 %v963, 1e-24
    %v1024 = vmax.f32 %v965, 1e-24
    %v1025 = vmax.f32 %v967, 1e-24
    %v1026 = vmax.f32 %v969, 1e-24
    %v1027 = vmax.f32 %v971, 1e-24
    %v1028 = vmax.f32 %v973, 1e-24
    %v1029 = vmax.f32 %v975, 1e-24
    %v1030 = vmax.f32 %v977, 1e-24
    %v1031 = vmax.f32 %v979, 1e-24
    %v1032 = vmax.f32 %v981, 1e-24
    %v1033 = vmax.f32 %v983, 1e-24
    %v1034 = vmax.f32 %v985, 1e-24
    %v1035 = vmax.f32 %v987, 1e-24
    %v1036 = vmax.f32 %v989, 1e-24
    %v1037 = vmax.f32 %v991, 1e-24
    %v1038 = vmax.f32 %v993, 1e-24
    %v1039 = vmax.f32 %v995, 1e-24
    %v1040 = vmax.f32 %v997, 1e-24
    %v1041 = vmax.f32 %v999, 1e-24
    %v1042 = vmax.f32 %v1001, 1e-24
    %v1043 = vmax.f32 %v1003, 1e-24
    %v1044 = vmax.f32 %v1005, 1e-24
    %v1045 = vmax.f32 %v1007, 1e-24
    %v1046 = vmax.f32 %v1009, 1e-24
    %v1047 = vmax.f32 %v1011, 1e-24
    %v1048 = vmax.f32 %v1013, 1e-24
    %v1049 = vmax.f32 %v1015, 1e-24
    %v1050 = vmax.f32 %v1017, 1e-24
    %v1051 = vmax.f32 %v1019, 1e-24
    %v1052 = vrsqrt.pop %v1020
    %v1053 = vrsqrt.pop %v1021
    %v1054 = vrsqrt.pop %v1022
    %v1055 = vrsqrt.pop %v1023
    %v1056 = vrsqrt.pop %v1024
    %v1057 = vrsqrt.pop %v1025
    %v1058 = vrsqrt.pop %v1026
    %v1059 = vrsqrt.pop %v1027
    %v1060 = vrsqrt.pop %v1028
    %v1061 = vrsqrt.pop %v1029
    %v1062 = vrsqrt.pop %v1030
    %v1063 = vrsqrt.pop %v1031
    %v1064 = vrsqrt.pop %v1032
    %v1065 = vrsqrt.pop %v1033
    %v1066 = vrsqrt.pop %v1034
    %v1067 = vrsqrt.pop %v1035
    %v1068 = vrsqrt.pop %v1036
    %v1069 = vrsqrt.pop %v1037
    %v1070 = vrsqrt.pop %v1038
    %v1071 = vrsqrt.pop %v1039
    %v1072 = vrsqrt.pop %v1040
    %v1073 = vrsqrt.pop %v1041
    %v1074 = vrsqrt.pop %v1042
    %v1075 = vrsqrt.pop %v1043
    %v1076 = vrsqrt.pop %v1044
    %v1077 = vrsqrt.pop %v1045
    %v1078 = vrsqrt.pop %v1046
    %v1079 = vrsqrt.pop %v1047
    %v1080 = vrsqrt.pop %v1048
    %v1081 = vrsqrt.pop %v1049
    %v1082 = vrsqrt.pop %v1050
    %v1083 = vrsqrt.pop %v1051
    %v1084 = vmul.f32 %v1052, 2.0
    %v1085 = vmul.f32 %v1053, 2.0
    %v1086 = vmul.f32 %v1054, 2.0
    %v1087 = vmul.f32 %v1055, 2.0
    %v1088 = vmul.f32 %v1056, 2.0
    %v1089 = vmul.f32 %v1057, 2.0
    %v1090 = vmul.f32 %v1058, 2.0
    %v1091 = vmul.f32 %v1059, 2.0
    %v1092 = vmul.f32 %v1060, 2.0
    %v1093 = vmul.f32 %v1061, 2.0
    %v1094 = vmul.f32 %v1062, 2.0
    %v1095 = vmul.f32 %v1063, 2.0
    %v1096 = vmul.f32 %v1064, 2.0
    %v1097 = vmul.f32 %v1065, 2.0
    %v1098 = vmul.f32 %v1066, 2.0
    %v1099 = vmul.f32 %v1067, 2.0
    %v1100 = vmul.f32 %v1068, 2.0
    %v1101 = vmul.f32 %v1069, 2.0
    %v1102 = vmul.f32 %v1070, 2.0
    %v1103 = vmul.f32 %v1071, 2.0
    %v1104 = vmul.f32 %v1072, 2.0
    %v1105 = vmul.f32 %v1073, 2.0
    %v1106 = vmul.f32 %v1074, 2.0
    %v1107 = vmul.f32 %v1075, 2.0
    %v1108 = vmul.f32 %v1076, 2.0
    %v1109 = vmul.f32 %v1077, 2.0
    %v1110 = vmul.f32 %v1078, 2.0
    %v1111 = vmul.f32 %v1079, 2.0
    %v1112 = vmul.f32 %v1080, 2.0
    %v1113 = vmul.f32 %v1081, 2.0
    %v1114 = vmul.f32 %v1082, 2.0
    %v1115 = vmul.f32 %v1083, 2.0
    %v1116 = vmul.f32 %v892, %v1084
    %v1117 = vmul.f32 %v893, %v1085
    %v1118 = vmul.f32 %v894, %v1086
    %v1119 = vmul.f32 %v895, %v1087
    %v1120 = vmul.f32 %v896, %v1088
    %v1121 = vmul.f32 %v897, %v1089
    %v1122 = vmul.f32 %v898, %v1090
    %v1123 = vmul.f32 %v899, %v1091
    %v1124 = vmul.f32 %v900, %v1092
    %v1125 = vmul.f32 %v901, %v1093
    %v1126 = vmul.f32 %v902, %v1094
    %v1127 = vmul.f32 %v903, %v1095
    %v1128 = vmul.f32 %v904, %v1096
    %v1129 = vmul.f32 %v905, %v1097
    %v1130 = vmul.f32 %v906, %v1098
    %v1131 = vmul.f32 %v907, %v1099
    %v1132 = vmul.f32 %v908, %v1100
    %v1133 = vmul.f32 %v909, %v1101
    %v1134 = vmul.f32 %v910, %v1102
    %v1135 = vmul.f32 %v911, %v1103
    %v1136 = vmul.f32 %v912, %v1104
    %v1137 = vmul.f32 %v913, %v1105
    %v1138 = vmul.f32 %v914, %v1106
    %v1139 = vmul.f32 %v915, %v1107
    %v1140 = vmul.f32 %v916, %v1108
    %v1141 = vmul.f32 %v917, %v1109
    %v1142 = vmul.f32 %v918, %v1110
    %v1143 = vmul.f32 %v919, %v1111
    %v1144 = vmul.f32 %v920, %v1112
    %v1145 = vmul.f32 %v921, %v1113
    %v1146 = vmul.f32 %v922, %v1114
    %v1147 = vmul.f32 %v923, %v1115
    %v1148 = vmax.f32 %v1116, 0.0
    %v1149 = vmax.f32 %v1117, 0.0
    %v1150 = vmax.f32 %v1118, 0.0
    %v1151 = vmax.f32 %v1119, 0.0
    %v1152 = vmax.f32 %v1120, 0.0
    %v1153 = vmax.f32 %v1121, 0.0
    %v1154 = vmax.f32 %v1122, 0.0
    %v1155 = vmax.f32 %v1123, 0.0
    %v1156 = vmax.f32 %v1124, 0.0
    %v1157 = vmax.f32 %v1125, 0.0
    %v1158 = vmax.f32 %v1126, 0.0
    %v1159 = vmax.f32 %v1127, 0.0
    %v1160 = vmax.f32 %v1128, 0.0
    %v1161 = vmax.f32 %v1129, 0.0
    %v1162 = vmax.f32 %v1130, 0.0
    %v1163 = vmax.f32 %v1131, 0.0
    %v1164 = vmax.f32 %v1132, 0.0
    %v1165 = vmax.f32 %v1133, 0.0
    %v1166 = vmax.f32 %v1134, 0.0
    %v1167 = vmax.f32 %v1135, 0.0
    %v1168 = vmax.f32 %v1136, 0.0
    %v1169 = vmax.f32 %v1137, 0.0
    %v1170 = vmax.f32 %v1138, 0.0
    %v1171 = vmax.f32 %v1139, 0.0
    %v1172 = vmax.f32 %v1140, 0.0
    %v1173 = vmax.f32 %v1141, 0.0
    %v1174 = vmax.f32 %v1142, 0.0
    %v1175 = vmax.f32 %v1143, 0.0
    %v1176 = vmax.f32 %v1144, 0.0
    %v1177 = vmax.f32 %v1145, 0.0
    %v1178 = vmax.f32 %v1146, 0.0
    %v1179 = vmax.f32 %v1147, 0.0
    %1180 = vst [vmem:[%s3] sm:$0xff] %v1148
    %1181 = vst [vmem:[%s3 + $0x8] sm:$0xff] %v1149
    %1182 = vst [vmem:[%s3 + $0x10] sm:$0xff] %v1150
    %1183 = vst [vmem:[%s3 + $0x18] sm:$0xff] %v1151
    %1184 = vst [vmem:[%s3 + $0x20] sm:$0xff] %v1152
    %1185 = vst [vmem:[%s3 + $0x28] sm:$0xff] %v1153
    %1186 = vst [vmem:[%s3 + $0x30] sm:$0xff] %v1154
    %1187 = vst [vmem:[%s3 + $0x38] sm:$0xff] %v1155
    %1188 = vst [vmem:[%s3 + $0x40] sm:$0xff] %v1156
    %1189 = vst [vmem:[%s3 + $0x48] sm:$0xff] %v1157
    %1190 = vst [vmem:[%s3 + $0x50] sm:$0xff] %v1158
    %1191 = vst [vmem:[%s3 + $0x58] sm:$0xff] %v1159
    %1192 = vst [vmem:[%s3 + $0x60] sm:$0xff] %v1160
    %1193 = vst [vmem:[%s3 + $0x68] sm:$0xff] %v1161
    %1194 = vst [vmem:[%s3 + $0x70] sm:$0xff] %v1162
    %1195 = vst [vmem:[%s3 + $0x78] sm:$0xff] %v1163
    %1196 = vst [vmem:[%s3 + $0x80] sm:$0xff] %v1164
    %1197 = vst [vmem:[%s3 + $0x88] sm:$0xff] %v1165
    %1198 = vst [vmem:[%s3 + $0x90] sm:$0xff] %v1166
    %1199 = vst [vmem:[%s3 + $0x98] sm:$0xff] %v1167
    %1200 = vst [vmem:[%s3 + $0xa0] sm:$0xff] %v1168
    %1201 = vst [vmem:[%s3 + $0xa8] sm:$0xff] %v1169
    %1202 = vst [vmem:[%s3 + $0xb0] sm:$0xff] %v1170
    %1203 = vst [vmem:[%s3 + $0xb8] sm:$0xff] %v1171
    %1204 = vst [vmem:[%s3 + $0xc0] sm:$0xff] %v1172
    %1205 = vst [vmem:[%s3 + $0xc8] sm:$0xff] %v1173
    %1206 = vst [vmem:[%s3 + $0xd0] sm:$0xff] %v1174
    %1207 = vst [vmem:[%s3 + $0xd8] sm:$0xff] %v1175
    %1208 = vst [vmem:[%s3 + $0xe0] sm:$0xff] %v1176
    %1209 = vst [vmem:[%s3 + $0xe8] sm:$0xff] %v1177
    %1210 = vst [vmem:[%s3 + $0xf0] sm:$0xff] %v1178
    %1211 = vst [vmem:[%s3 + $0xf8] sm:$0xff] %v1179
  $region21: #{graphsage_e_forward.3} parent=0 // pred_fallthru
    _
  // Predicated region
  $region22: #{graphsage_e_forward.3} parent=0 // pred_check
    _
  $region23: #{graphsage_e_forward.3} parent=0 // pred_check_branch
    %1213 = sbr.rel (0) target = $region25
  $region24: #{graphsage_e_forward.3} parent=0 // pred_region
    _
  $region25: #{graphsage_e_forward.3} parent=0 // pred_fallthru
    _
  // Predicated region
  $region26: #{graphsage_e_forward.3} parent=0 // pred_check
    _
  $region27: #{graphsage_e_forward.3} parent=0 // pred_check_branch
    %1215 = sbr.rel (0) target = $region29
  $region28: #{graphsage_e_forward.3} parent=0 // pred_region
    _
  $region29: #{graphsage_e_forward.3} parent=0 // pred_fallthru
    _

</llo_original>
